<compile_context>
chip_gen: v6e
topology: v6e:2x2x1
jax: 0.10.0
libtpu: 0.0.40
codegen_flags: <defaults>
</compile_context>

<pallas_src>
import functools

import jax
import jax.numpy as jnp
from jax import lax
from jax.experimental import pallas as pl
from jax.experimental.pallas import tpu as pltpu


def _nonlocal_kernel(xq_ref, xk_ref,
                     wt_ref, bt_ref,
                     wpg_ref, bpg_ref,
                     ww_ref, bw_ref,
                     o_ref,
                     phi_sc, g_sc,
                     *, inter_ch):
    # ---- once per batch: pooled phi / g projections cached in VMEM scratch ----
    @pl.when(pl.program_id(1) == 0)
    def _():
        wpg = wpg_ref[...]                                     # (Cp, 2*Cip) bf16

        def proj(k):                                           # (Ns, 2*Cip) f32 acc
            return jnp.dot(xk_ref[0, k], wpg,
                           preferred_element_type=jnp.float32)

        # 2x2 max-pool after the 1x1 conv == elementwise max over the 4 window
        # slots; the per-channel bias commutes with max, so add it after pooling.
        pg = proj(0)
        for k in range(1, 4):
            pg = jnp.maximum(pg, proj(k))
        pg = pg + bpg_ref[...]
        phi_sc[...] = pg[:, :inter_ch].astype(phi_sc.dtype)    # (Ns, Cip) bf16
        g_sc[...] = pg[:, inter_ch:].astype(g_sc.dtype)        # (Ns, Cip) bf16

    # ---- per query tile ----
    xq = xq_ref[0]                                             # (T, Cp) f32 (residual)
    theta = jnp.dot(xq.astype(jnp.bfloat16), wt_ref[...],
                    preferred_element_type=jnp.float32) + bt_ref[...]    # (T, Cip)

    # f = theta @ phi^T  (bf16 operands, f32 accumulation; the MXU's transposed
    # RHS path handles the contraction on dim 1 of both operands natively, same
    # as q @ k^T in flash attention).
    f = lax.dot_general(theta.astype(jnp.bfloat16), phi_sc[...],
                        (((1,), (1,)), ((), ())),
                        preferred_element_type=jnp.float32)    # (T, Ns)

    # softmax over keys — f32 elementwise (v5e-safe); normalization is deferred
    # to after the value matmul (scale the (T, Ci) result, not the (T, Ns) attn).
    f = f - jnp.max(f, axis=-1, keepdims=True)
    p = jnp.exp(f)                                             # (T, Ns) f32
    denom = jnp.sum(p, axis=-1, keepdims=True)                 # (T, 1)  f32

    # y_un = p @ g  (bf16 operands, f32 accumulation), then EUP approx recip.
    y = jnp.dot(p.astype(jnp.bfloat16), g_sc[...],
                preferred_element_type=jnp.float32)            # (T, Cip)
    y = y * pl.reciprocal(denom, approx=True)

    # W conv (Ci -> C) with eval-mode BatchNorm folded in, then residual.
    wy = jnp.dot(y.astype(jnp.bfloat16), ww_ref[...],
                 preferred_element_type=jnp.float32) + bw_ref[...]       # (T, Cp)
    o_ref[0] = (wy + xq).astype(o_ref.dtype)


def _round_up(x, m):
    return ((x + m - 1) // m) * m


def _pick_tile_n(n_total, requested):
    """Largest divisor of n_total that is <= requested and sublane-friendly."""
    t = min(requested, n_total)
    ok = [d for d in range(1, n_total + 1)
          if n_total % d == 0 and d <= t and (d % 8 == 0 or d == n_total)]
    return max(ok) if ok else n_total


def _vmem_budget_bytes():
    """~85% of this generation's per-core VMEM (128 MiB v5e/v6e, 64 MiB v7x)."""
    cap = 64 << 20
    try:
        info = pltpu.get_tpu_info()
        cap = int(getattr(info, "vmem_capacity_bytes", cap)) or cap
    except Exception:
        pass
    return int(0.85 * cap)


def _vmem_limit_bytes(tile_n, n_sub, c, ci):
    f32, bf16 = 4, 2
    est = 0
    est += 2 * tile_n * c * f32 * 2                       # xq + out (double-buffered)
    est += 2 * 4 * n_sub * c * bf16                       # key/value stream (bf16)
    est += 2 * (c * ci + c * 2 * ci + ci * c) * bf16      # bf16 weights (dbl-buffered)
    est += 2 * (3 * ci + c) * f32                         # biases
    est += 2 * n_sub * ci * bf16                          # phi / g scratch
    est += (2 * tile_n * n_sub + 2 * tile_n * ci + 2 * tile_n * c
            + 4 * n_sub * 2 * ci) * f32                   # in-kernel intermediates
    return int(min(_vmem_budget_bytes(), max(32 << 20, 2 * est)))


def nonlocal_block_2d(x, params, *, tile_n=512):
    """x: (B, C, H, W) float32. Returns z: (B, C, H, W)."""
    B, C, H, W = x.shape
    assert H % 2 == 0 and W % 2 == 0, "sub_sample=True requires even H and W"
    Ci = params["w_theta"].shape[1]
    N = H * W
    Ns = (H // 2) * (W // 2)
    T = _pick_tile_n(N, tile_n)

    # Lane-dense channel padding (exact: padded channels are zero everywhere,
    # including through the residual, and are sliced off at the end).
    LANE = 128
    Cp = _round_up(C, LANE)
    Cip = _round_up(Ci, LANE)

    # NCHW -> channel-last, window(slot)-major spatial order.
    x_hwc = jnp.transpose(x, (0, 2, 3, 1))                               # (B,H,W,C)
    if Cp != C:
        x_hwc = jnp.pad(x_hwc, ((0, 0), (0, 0), (0, 0), (0, Cp - C)))
    x_win4 = (x_hwc.reshape(B, H // 2, 2, W // 2, 2, Cp)
              .transpose(0, 2, 4, 1, 3, 5)                               # (B,2,2,H/2,W/2,Cp)
              .reshape(B, 4, Ns, Cp))
    x_win = x_win4.reshape(B, N, Cp)                                     # queries, f32
    x_win4_b = x_win4.astype(jnp.bfloat16)                               # keys/values, bf16

    def padw(w, rout, cout):
        return jnp.pad(w, ((0, rout - w.shape[0]), (0, cout - w.shape[1])))

    def padv(v, n):
        return jnp.pad(v, (0, n - v.shape[0]))

    w_theta = padw(params["w_theta"], Cp, Cip)
    b_theta = padv(params["b_theta"], Cip)
    w_phi = padw(params["w_phi"], Cp, Cip)
    b_phi = padv(params["b_phi"], Cip)
    w_g = padw(params["w_g"], Cp, Cip)
    b_g = padv(params["b_g"], Cip)

    # Fuse the phi/g projections into a single (Cp, 2*Cip) matmul.
    w_pg = jnp.concatenate([w_phi, w_g], axis=1)                         # (Cp, 2Cip)
    b_pg = jnp.concatenate([b_phi, b_g]).reshape(1, 2 * Cip)

    # Fold eval-mode BatchNorm into the W conv:
    #   (y@w + b)*scale + shift == y@(w*scale) + (b*scale + shift)
    # TODO(synk): training-mode BatchNorm (batch statistics) is not computed
    # in-kernel; running stats (eval mode) are folded here.
    eps = 1e-5
    scale = params["bn_gamma"] / jnp.sqrt(params["bn_var"] + eps)        # (C,)
    shift = params["bn_beta"] - params["bn_mean"] * scale
    w_w_eff = padw(params["w_w"] * scale[None, :], Cip, Cp)              # (Cip, Cp)
    b_w_eff = padv(params["b_w"] * scale + shift, Cp).reshape(1, Cp)

    # Pre-cast weights to bf16 once (MXU runs bf16 x bf16 -> f32 natively).
    wt_b = w_theta.astype(jnp.bfloat16)
    wpg_b = w_pg.astype(jnp.bfloat16)
    ww_b = w_w_eff.astype(jnp.bfloat16)

    kernel = functools.partial(_nonlocal_kernel, inter_ch=Cip)

    def wspec(shape):
        return pl.BlockSpec(shape, lambda b, n: (0, 0))

    z_win = pl.pallas_call(
        kernel,
        out_shape=jax.ShapeDtypeStruct((B, N, Cp), x.dtype),
        grid=(B, N // T),
        in_specs=[
            pl.BlockSpec((1, T, Cp), lambda b, n: (b, n, 0)),            # query tile (f32)
            pl.BlockSpec((1, 4, Ns, Cp), lambda b, n: (b, 0, 0, 0)),     # keys/values (bf16)
            wspec((Cp, Cip)), wspec((1, Cip)),                           # theta
            wspec((Cp, 2 * Cip)), wspec((1, 2 * Cip)),                   # fused phi/g
            wspec((Cip, Cp)), wspec((1, Cp)),                            # W conv (BN folded)
        ],
        out_specs=pl.BlockSpec((1, T, Cp), lambda b, n: (b, n, 0)),
        scratch_shapes=[pltpu.VMEM((Ns, Cip), jnp.bfloat16),             # phi cache
                        pltpu.VMEM((Ns, Cip), jnp.bfloat16)],            # g cache
        compiler_params=pltpu.CompilerParams(
            dimension_semantics=("parallel", "arbitrary"),
            vmem_limit_bytes=_vmem_limit_bytes(T, Ns, Cp, Cip)),
    )(x_win, x_win4_b,
      wt_b, b_theta.reshape(1, Cip),
      wpg_b, b_pg, ww_b, b_w_eff)

    # window order -> NCHW (and drop channel padding).
    z = (z_win.reshape(B, 2, 2, H // 2, W // 2, Cp)
         .transpose(0, 3, 1, 4, 2, 5)                                    # (B,H/2,2,W/2,2,Cp)
         .reshape(B, H, W, Cp)[..., :C]
         .transpose(0, 3, 1, 2))
    return z


def reference_nonlocal_2d(x, params):
    """Pure-JAX mirror of the PyTorch forward (for verification)."""
    B, C, H, W = x.shape
    Ci = params["w_theta"].shape[1]

    def conv1x1(inp, w, b):  # inp (B,Cin,H,W), w (Cin,Cout)
        return jnp.einsum('bchw,co->bohw', inp, w) + b[None, :, None, None]

    def pool2x2(a):
        Bq, Cq, Hq, Wq = a.shape
        return a.reshape(Bq, Cq, Hq // 2, 2, Wq // 2, 2).max(axis=(3, 5))

    theta = conv1x1(x, params["w_theta"], params["b_theta"]).reshape(B, Ci, -1).transpose(0, 2, 1)
    phi = pool2x2(conv1x1(x, params["w_phi"], params["b_phi"])).reshape(B, Ci, -1)
    g = pool2x2(conv1x1(x, params["w_g"], params["b_g"])).reshape(B, Ci, -1).transpose(0, 2, 1)
    f = jnp.einsum('bnc,bcm->bnm', theta, phi)
    attn = jax.nn.softmax(f, axis=-1)
    y = jnp.einsum('bnm,bmc->bnc', attn, g).transpose(0, 2, 1).reshape(B, Ci, H, W)
    wy = conv1x1(y, params["w_w"], params["b_w"])
    eps = 1e-5
    scale = params["bn_gamma"] / jnp.sqrt(params["bn_var"] + eps)
    shift = params["bn_beta"] - params["bn_mean"] * scale
    wy = wy * scale[None, :, None, None] + shift[None, :, None, None]
    return wy + x


def make_params(key, in_channels, inter_channels):
    """Deterministic params. Conv weights ~ N(0, 0.1); BN follows the module's
    constant_(0) init (running stats default to mean=0, var=1, eval mode)."""
    ks = jax.random.split(key, 8)
    C, Ci = in_channels, inter_channels
    s = 0.1
    return {
        "w_theta": s * jax.random.normal(ks[0], (C, Ci), jnp.float32),
        "b_theta": s * jax.random.normal(ks[1], (Ci,), jnp.float32),
        "w_phi":   s * jax.random.normal(ks[2], (C, Ci), jnp.float32),
        "b_phi":   s * jax.random.normal(ks[3], (Ci,), jnp.float32),
        "w_g":     s * jax.random.normal(ks[4], (C, Ci), jnp.float32),
        "b_g":     s * jax.random.normal(ks[5], (Ci,), jnp.float32),
        "w_w":     s * jax.random.normal(ks[6], (Ci, C), jnp.float32),
        "b_w":     s * jax.random.normal(ks[7], (C,), jnp.float32),
        # nn.init.constant_(W[1].weight, 0) / constant_(W[1].bias, 0):
        "bn_gamma": jnp.zeros((C,), jnp.float32),
        "bn_beta":  jnp.zeros((C,), jnp.float32),
        "bn_mean":  jnp.zeros((C,), jnp.float32),
        "bn_var":   jnp.ones((C,), jnp.float32),
    }


if __name__ == "__main__":
    key = jax.random.PRNGKey(0)
    kx, kp = jax.random.split(key)

    B, C, H, W = 2, 4, 16, 16
    Ci = C // 2  # inter_channels default = in_channels // 2
    x = jax.random.normal(kx, (B, C, H, W), jnp.float32)

    params = make_params(kp, C, Ci)

    # Faithful init (BN gamma/beta = 0 -> W_y == 0 -> z == x, as in the module).
    # tile_n=128 gives 2 query tiles per batch, exercising the phi/g scratch cache.
    z = jax.block_until_ready(nonlocal_block_2d(x, params, tile_n=128))
    z_ref = reference_nonlocal_2d(x, params)
    assert jnp.allclose(z, z_ref, atol=1e-5, rtol=1e-5)

    # Non-trivial BN affine exercises the full bf16 attention + projection path.
    params2 = dict(params, bn_gamma=jnp.ones((C,), jnp.float32),
                   bn_beta=0.5 * jnp.ones((C,), jnp.float32))
    z2 = jax.block_until_ready(nonlocal_block_2d(x, params2, tile_n=128))
    z2_ref = reference_nonlocal_2d(x, params2)
    assert jnp.allclose(z2, z2_ref, atol=2e-2, rtol=2e-2)

    print("KERNEL_OK")
</pallas_src>

<mosaic_0001>
module attributes {stable_mosaic.version = 11 : i64} {
  func.func @_nonlocal_kernel(%arg0: i32, %arg1: i32, %arg2: memref<1x128x128xf32, #tpu.memory_space<vmem>>, %arg3: memref<1x4x64x128xbf16, #tpu.memory_space<vmem>>, %arg4: memref<128x128xbf16, #tpu.memory_space<vmem>>, %arg5: memref<1x128xf32, #tpu.memory_space<vmem>>, %arg6: memref<128x256xbf16, #tpu.memory_space<vmem>>, %arg7: memref<1x256xf32, #tpu.memory_space<vmem>>, %arg8: memref<128x128xbf16, #tpu.memory_space<vmem>>, %arg9: memref<1x128xf32, #tpu.memory_space<vmem>>, %arg10: memref<1x128x128xf32, #tpu.memory_space<vmem>>, %arg11: memref<64x128xbf16, #tpu.memory_space<vmem>>, %arg12: memref<64x128xbf16, #tpu.memory_space<vmem>>) attributes {dimension_semantics = [#tpu.dimension_semantics<parallel>, #tpu.dimension_semantics<arbitrary>], iteration_bounds = array<i64: 2, 2>, scalar_prefetch = 0 : i64, scratch_operands = 2 : i64, tpu.core_type = #tpu.core_type<tc>, window_params = [{transform_indices = @transform_0, window_bounds = array<i64: 1, 128, 128>}, {transform_indices = @transform_1, window_bounds = array<i64: 1, 4, 64, 128>}, {pipeline_mode = #tpu.pipeline_mode<synchronous>, transform_indices = @transform_2, window_bounds = array<i64: 128, 128>}, {pipeline_mode = #tpu.pipeline_mode<synchronous>, transform_indices = @transform_3, window_bounds = array<i64: 1, 128>}, {pipeline_mode = #tpu.pipeline_mode<synchronous>, transform_indices = @transform_4, window_bounds = array<i64: 128, 256>}, {pipeline_mode = #tpu.pipeline_mode<synchronous>, transform_indices = @transform_5, window_bounds = array<i64: 1, 256>}, {pipeline_mode = #tpu.pipeline_mode<synchronous>, transform_indices = @transform_6, window_bounds = array<i64: 128, 128>}, {pipeline_mode = #tpu.pipeline_mode<synchronous>, transform_indices = @transform_7, window_bounds = array<i64: 1, 128>}, {transform_indices = @transform_8, window_bounds = array<i64: 1, 128, 128>}]} {
    %c0_i32 = arith.constant 0 : i32
    %0 = arith.cmpi eq, %arg1, %c0_i32 : i32
    %1 = arith.extui %0 : i1 to i32
    %c0_i32_0 = arith.constant 0 : i32
    %2 = arith.cmpi ne, %1, %c0_i32_0 : i32
    scf.if %2 {
      %c0_23 = arith.constant 0 : index
      %c0_24 = arith.constant 0 : index
      %37 = vector.load %arg6[%c0_23, %c0_24] : memref<128x256xbf16, #tpu.memory_space<vmem>>, vector<128x256xbf16>
      %c0_25 = arith.constant 0 : index
      %c0_26 = arith.constant 0 : index
      %c0_27 = arith.constant 0 : index
      %c0_28 = arith.constant 0 : index
      %38 = vector.load %arg3[%c0_25, %c0_26, %c0_27, %c0_28] : memref<1x4x64x128xbf16, #tpu.memory_space<vmem>>, vector<1x1x64x128xbf16>
      %39 = vector.shape_cast %38 : vector<1x1x64x128xbf16> to vector<64x128xbf16>
      %cst_29 = arith.constant dense<0.000000e+00> : vector<64x256xf32>
      %40 = tpu.matmul %39, %37, %cst_29 {dimension_numbers = #tpu.dot_dimension_numbers<[1], [0], [0], [1], [0, 0, 1, 1], [], []>} : vector<64x128xbf16>, vector<128x256xbf16>, vector<64x256xf32> -> vector<64x256xf32>
      %c0_30 = arith.constant 0 : index
      %c1 = arith.constant 1 : index
      %c0_31 = arith.constant 0 : index
      %c0_32 = arith.constant 0 : index
      %41 = vector.load %arg3[%c0_30, %c1, %c0_31, %c0_32] : memref<1x4x64x128xbf16, #tpu.memory_space<vmem>>, vector<1x1x64x128xbf16>
      %42 = vector.shape_cast %41 : vector<1x1x64x128xbf16> to vector<64x128xbf16>
      %cst_33 = arith.constant dense<0.000000e+00> : vector<64x256xf32>
      %43 = tpu.matmul %42, %37, %cst_33 {dimension_numbers = #tpu.dot_dimension_numbers<[1], [0], [0], [1], [0, 0, 1, 1], [], []>} : vector<64x128xbf16>, vector<128x256xbf16>, vector<64x256xf32> -> vector<64x256xf32>
      %44 = arith.maximumf %40, %43 : vector<64x256xf32>
      %c0_34 = arith.constant 0 : index
      %c2 = arith.constant 2 : index
      %c0_35 = arith.constant 0 : index
      %c0_36 = arith.constant 0 : index
      %45 = vector.load %arg3[%c0_34, %c2, %c0_35, %c0_36] : memref<1x4x64x128xbf16, #tpu.memory_space<vmem>>, vector<1x1x64x128xbf16>
      %46 = vector.shape_cast %45 : vector<1x1x64x128xbf16> to vector<64x128xbf16>
      %cst_37 = arith.constant dense<0.000000e+00> : vector<64x256xf32>
      %47 = tpu.matmul %46, %37, %cst_37 {dimension_numbers = #tpu.dot_dimension_numbers<[1], [0], [0], [1], [0, 0, 1, 1], [], []>} : vector<64x128xbf16>, vector<128x256xbf16>, vector<64x256xf32> -> vector<64x256xf32>
      %48 = arith.maximumf %44, %47 : vector<64x256xf32>
      %c0_38 = arith.constant 0 : index
      %c3 = arith.constant 3 : index
      %c0_39 = arith.constant 0 : index
      %c0_40 = arith.constant 0 : index
      %49 = vector.load %arg3[%c0_38, %c3, %c0_39, %c0_40] : memref<1x4x64x128xbf16, #tpu.memory_space<vmem>>, vector<1x1x64x128xbf16>
      %50 = vector.shape_cast %49 : vector<1x1x64x128xbf16> to vector<64x128xbf16>
      %cst_41 = arith.constant dense<0.000000e+00> : vector<64x256xf32>
      %51 = tpu.matmul %50, %37, %cst_41 {dimension_numbers = #tpu.dot_dimension_numbers<[1], [0], [0], [1], [0, 0, 1, 1], [], []>} : vector<64x128xbf16>, vector<128x256xbf16>, vector<64x256xf32> -> vector<64x256xf32>
      %52 = arith.maximumf %48, %51 : vector<64x256xf32>
      %c0_42 = arith.constant 0 : index
      %c0_43 = arith.constant 0 : index
      %53 = vector.load %arg7[%c0_42, %c0_43] : memref<1x256xf32, #tpu.memory_space<vmem>>, vector<1x256xf32>
      %54 = vector.broadcast %53 : vector<1x256xf32> to vector<64x256xf32>
      %55 = arith.addf %52, %54 : vector<64x256xf32>
      %56 = vector.extract_strided_slice %55 {offsets = [0, 0], sizes = [64, 128], strides = [1, 1]} : vector<64x256xf32> to vector<64x128xf32>
      %57 = arith.truncf %56 : vector<64x128xf32> to vector<64x128xbf16>
      %c0_44 = arith.constant 0 : index
      %c0_45 = arith.constant 0 : index
      %58 = vector.load %arg11[%c0_44, %c0_45] : memref<64x128xbf16, #tpu.memory_space<vmem>>, vector<64x128xbf16>
      tpu.vector_store %arg11[%c0_44, %c0_45], %57 {strides = array<i32>} : memref<64x128xbf16, #tpu.memory_space<vmem>>, vector<64x128xbf16>,
      %59 = vector.extract_strided_slice %55 {offsets = [0, 128], sizes = [64, 128], strides = [1, 1]} : vector<64x256xf32> to vector<64x128xf32>
      %60 = arith.truncf %59 : vector<64x128xf32> to vector<64x128xbf16>
      %c0_46 = arith.constant 0 : index
      %c0_47 = arith.constant 0 : index
      %61 = vector.load %arg12[%c0_46, %c0_47] : memref<64x128xbf16, #tpu.memory_space<vmem>>, vector<64x128xbf16>
      tpu.vector_store %arg12[%c0_46, %c0_47], %60 {strides = array<i32>} : memref<64x128xbf16, #tpu.memory_space<vmem>>, vector<64x128xbf16>,
    } else {
    }
    %c0 = arith.constant 0 : index
    %c0_1 = arith.constant 0 : index
    %c0_2 = arith.constant 0 : index
    %3 = vector.load %arg2[%c0, %c0_1, %c0_2] : memref<1x128x128xf32, #tpu.memory_space<vmem>>, vector<1x128x128xf32>
    %4 = vector.shape_cast %3 : vector<1x128x128xf32> to vector<128x128xf32>
    %5 = arith.truncf %4 : vector<128x128xf32> to vector<128x128xbf16>
    %c0_3 = arith.constant 0 : index
    %c0_4 = arith.constant 0 : index
    %6 = vector.load %arg4[%c0_3, %c0_4] : memref<128x128xbf16, #tpu.memory_space<vmem>>, vector<128x128xbf16>
    %cst = arith.constant dense<0.000000e+00> : vector<128x128xf32>
    %7 = tpu.matmul %5, %6, %cst {dimension_numbers = #tpu.dot_dimension_numbers<[1], [0], [0], [1], [0, 0, 1, 1], [], []>} : vector<128x128xbf16>, vector<128x128xbf16>, vector<128x128xf32> -> vector<128x128xf32>
    %c0_5 = arith.constant 0 : index
    %c0_6 = arith.constant 0 : index
    %8 = vector.load %arg5[%c0_5, %c0_6] : memref<1x128xf32, #tpu.memory_space<vmem>>, vector<1x128xf32>
    %9 = vector.broadcast %8 : vector<1x128xf32> to vector<128x128xf32>
    %10 = arith.addf %7, %9 : vector<128x128xf32>
    %11 = arith.truncf %10 : vector<128x128xf32> to vector<128x128xbf16>
    %c0_7 = arith.constant 0 : index
    %c0_8 = arith.constant 0 : index
    %12 = vector.load %arg11[%c0_7, %c0_8] : memref<64x128xbf16, #tpu.memory_space<vmem>>, vector<64x128xbf16>
    %cst_9 = arith.constant dense<0.000000e+00> : vector<128x64xf32>
    %13 = tpu.matmul %11, %12, %cst_9 {dimension_numbers = #tpu.dot_dimension_numbers<[1], [1], [0], [0], [0, 0, 1, 0], [], []>} : vector<128x128xbf16>, vector<64x128xbf16>, vector<128x64xf32> -> vector<128x64xf32>
    %cst_10 = arith.constant dense<0xFF800000> : vector<128xf32>
    %14 = vector.multi_reduction <maximumf>, %13, %cst_10 [1] : vector<128x64xf32> to vector<128xf32>
    %15 = vector.shape_cast %14 : vector<128xf32> to vector<128x1xf32>
    %16 = vector.broadcast %15 : vector<128x1xf32> to vector<128x64xf32>
    %17 = arith.subf %13, %16 : vector<128x64xf32>
    %18 = math.exp %17 : vector<128x64xf32>
    %cst_11 = arith.constant dense<0.000000e+00> : vector<128xf32>
    %19 = vector.multi_reduction <add>, %18, %cst_11 [1] : vector<128x64xf32> to vector<128xf32>
    %20 = vector.shape_cast %19 : vector<128xf32> to vector<128x1xf32>
    %21 = arith.truncf %18 : vector<128x64xf32> to vector<128x64xbf16>
    %c0_12 = arith.constant 0 : index
    %c0_13 = arith.constant 0 : index
    %22 = vector.load %arg12[%c0_12, %c0_13] : memref<64x128xbf16, #tpu.memory_space<vmem>>, vector<64x128xbf16>
    %cst_14 = arith.constant dense<0.000000e+00> : vector<128x128xf32>
    %23 = tpu.matmul %21, %22, %cst_14 {dimension_numbers = #tpu.dot_dimension_numbers<[1], [0], [0], [1], [0, 0, 1, 1], [], []>} : vector<128x64xbf16>, vector<64x128xbf16>, vector<128x128xf32> -> vector<128x128xf32>
    %24 = tpu.reciprocal %20 {approx = true} : vector<128x1xf32> -> vector<128x1xf32>
    %25 = vector.broadcast %24 : vector<128x1xf32> to vector<128x128xf32>
    %26 = arith.mulf %23, %25 : vector<128x128xf32>
    %27 = arith.truncf %26 : vector<128x128xf32> to vector<128x128xbf16>
    %c0_15 = arith.constant 0 : index
    %c0_16 = arith.constant 0 : index
    %28 = vector.load %arg8[%c0_15, %c0_16] : memref<128x128xbf16, #tpu.memory_space<vmem>>, vector<128x128xbf16>
    %cst_17 = arith.constant dense<0.000000e+00> : vector<128x128xf32>
    %29 = tpu.matmul %27, %28, %cst_17 {dimension_numbers = #tpu.dot_dimension_numbers<[1], [0], [0], [1], [0, 0, 1, 1], [], []>} : vector<128x128xbf16>, vector<128x128xbf16>, vector<128x128xf32> -> vector<128x128xf32>
    %c0_18 = arith.constant 0 : index
    %c0_19 = arith.constant 0 : index
    %30 = vector.load %arg9[%c0_18, %c0_19] : memref<1x128xf32, #tpu.memory_space<vmem>>, vector<1x128xf32>
    %31 = vector.broadcast %30 : vector<1x128xf32> to vector<128x128xf32>
    %32 = arith.addf %29, %31 : vector<128x128xf32>
    %33 = arith.addf %32, %4 : vector<128x128xf32>
    %c0_20 = arith.constant 0 : index
    %c0_21 = arith.constant 0 : index
    %c0_22 = arith.constant 0 : index
    %34 = vector.load %arg10[%c0_20, %c0_21, %c0_22] : memref<1x128x128xf32, #tpu.memory_space<vmem>>, vector<1x128x128xf32>
    %35 = vector.shape_cast %34 : vector<1x128x128xf32> to vector<128x128xf32>
    %36 = vector.shape_cast %33 : vector<128x128xf32> to vector<1x128x128xf32>
    tpu.vector_store %arg10[%c0_20, %c0_21, %c0_22], %36 {strides = array<i32>} : memref<1x128x128xf32, #tpu.memory_space<vmem>>, vector<1x128x128xf32>,
    return
  }
  func.func @transform_0(%arg0: i32, %arg1: i32) -> (i32, i32, i32) {
    %c0_i32 = arith.constant 0 : i32
    %c0_i32_0 = arith.constant 0 : i32
    return %arg0, %arg1, %c0_i32 : i32, i32, i32
  }
  func.func @transform_1(%arg0: i32, %arg1: i32) -> (i32, i32, i32, i32) {
    %c0_i32 = arith.constant 0 : i32
    %c0_i32_0 = arith.constant 0 : i32
    %c0_i32_1 = arith.constant 0 : i32
    %c0_i32_2 = arith.constant 0 : i32
    return %arg0, %c0_i32, %c0_i32_0, %c0_i32_1 : i32, i32, i32, i32
  }
  func.func @transform_2(%arg0: i32, %arg1: i32) -> (i32, i32) {
    %c0_i32 = arith.constant 0 : i32
    %c0_i32_0 = arith.constant 0 : i32
    %c0_i32_1 = arith.constant 0 : i32
    return %c0_i32, %c0_i32_0 : i32, i32
  }
  func.func @transform_3(%arg0: i32, %arg1: i32) -> (i32, i32) {
    %c0_i32 = arith.constant 0 : i32
    %c0_i32_0 = arith.constant 0 : i32
    %c0_i32_1 = arith.constant 0 : i32
    return %c0_i32, %c0_i32_0 : i32, i32
  }
  func.func @transform_4(%arg0: i32, %arg1: i32) -> (i32, i32) {
    %c0_i32 = arith.constant 0 : i32
    %c0_i32_0 = arith.constant 0 : i32
    %c0_i32_1 = arith.constant 0 : i32
    return %c0_i32, %c0_i32_0 : i32, i32
  }
  func.func @transform_5(%arg0: i32, %arg1: i32) -> (i32, i32) {
    %c0_i32 = arith.constant 0 : i32
    %c0_i32_0 = arith.constant 0 : i32
    %c0_i32_1 = arith.constant 0 : i32
    return %c0_i32, %c0_i32_0 : i32, i32
  }
  func.func @transform_6(%arg0: i32, %arg1: i32) -> (i32, i32) {
    %c0_i32 = arith.constant 0 : i32
    %c0_i32_0 = arith.constant 0 : i32
    %c0_i32_1 = arith.constant 0 : i32
    return %c0_i32, %c0_i32_0 : i32, i32
  }
  func.func @transform_7(%arg0: i32, %arg1: i32) -> (i32, i32) {
    %c0_i32 = arith.constant 0 : i32
    %c0_i32_0 = arith.constant 0 : i32
    %c0_i32_1 = arith.constant 0 : i32
    return %c0_i32, %c0_i32_0 : i32, i32
  }
  func.func @transform_8(%arg0: i32, %arg1: i32) -> (i32, i32, i32) {
    %c0_i32 = arith.constant 0 : i32
    %c0_i32_0 = arith.constant 0 : i32
    return %arg0, %arg1, %c0_i32 : i32, i32, i32
  }
}

</mosaic_0001>

<llo_original>
// kernel: tpu_custom_call.1
$region0: #{tpu_custom_call.1}
  #allocation0 [shape = 'u32[]', space=smem, size = 0x4, offset = 0x4, fixed_abs, tag = 'smem constant byte address 0x4 - core index']
  #allocation1 [shape = 'u32[144,128]{1,0:T(1,128)}', space=vmem, size = 0x12000, scoped, tag = 'internal scratch']
  #allocation2 [shape = 'bf16[64,128]{1,0:T(8,128)(2,1)}', space=vmem, size = 0x4000, scoped, tag = 'scratch operand']
  #allocation3 [shape = 'bf16[64,128]{1,0:T(8,128)(2,1)}', space=vmem, size = 0x4000, scoped, tag = 'scratch operand']
  %s0 = inlined_call_operand.hbm [shape: f32[2,256,128], index: 0, kind: input, shape index: {}]
  %s1 = inlined_call_operand.hbm [shape: bf16[2,4,64,128], index: 1, kind: input, shape index: {}]
  %s2 = inlined_call_operand.hbm [shape: bf16[128,128], index: 2, kind: input, shape index: {}]
  %s3 = inlined_call_operand.vmem [shape: f32[1,128], index: 3, kind: input, shape index: {}]
  %s4 = inlined_call_operand.hbm [shape: bf16[128,256], index: 4, kind: input, shape index: {}]
  %s5 = inlined_call_operand.vmem [shape: f32[1,256], index: 5, kind: input, shape index: {}]
  %s6 = inlined_call_operand.hbm [shape: bf16[128,128], index: 6, kind: input, shape index: {}]
  %s7 = inlined_call_operand.vmem [shape: f32[1,128], index: 7, kind: input, shape index: {}]
  %s8 = inlined_call_operand.hbm [shape: f32[2,256,128], index: 8, kind: output, shape index: {}]
  %s9 = sld [smem:[#allocation0]]
  $region89: #{tpu_custom_call.1} parent=0
    _
  %s11 = ssub.s32 1, %s9
  %s12 = scalar_select 0, %s11, %s9
  $region1: #{tpu_custom_call.1} parent=0
    #allocation4 [shape = 'u8[131072]{0}', space=vmem, size = 0x20000, scoped, tag = 'input window, operand 0']
    #allocation5 [shape = 's32[2]{0}', space=sflag, size = 0x8, scoped, tag = 'scoped memory for tpu_custom_call.1']
    #allocation6 [shape = 's32[2]{0}', space=sflag, size = 0x8, scoped, tag = 'scoped memory for tpu_custom_call.1']
    #allocation7 [shape = 'u8[131072]{0}', space=vmem, size = 0x20000, scoped, tag = 'input window, operand 1']
    #allocation8 [shape = 's32[2]{0}', space=sflag, size = 0x8, scoped, tag = 'scoped memory for tpu_custom_call.1']
    #allocation9 [shape = 'u8[32768]{0}', space=vmem, size = 0x8000, scoped, tag = 'input window, operand 2, single buffered']
    #allocation10 [shape = 'u8[65536]{0}', space=vmem, size = 0x10000, scoped, tag = 'input window, operand 4, single buffered']
    #allocation11 [shape = 's32[1]{0}', space=sflag, size = 0x4, scoped, tag = 'scoped memory for tpu_custom_call.1']
    #allocation12 [shape = 'u8[32768]{0}', space=vmem, size = 0x8000, scoped, tag = 'input window, operand 6, single buffered']
    #allocation13 [shape = 'u8[131072]{0}', space=vmem, size = 0x20000, scoped, tag = 'output window, operand 0']
    %13 = vsyncpa [#allocation5], 0
    %s14 = scalar_lea.sflag [#allocation5], 1
    %15 = vsyncpa %s14, 0
    %16 = vsyncpa [#allocation8], 0
    %s17 = scalar_lea.sflag [#allocation8], 1
    %18 = vsyncpa %s17, 0
    %19 = vsyncpa [#allocation11], 0
    %20 = vsyncpa [#allocation6], 0
    %s21 = scalar_lea.sflag [#allocation6], 1
    %22 = vsyncpa %s21, 0
    loop: start=0, step=1, limit=6
    $region2: #{tpu_custom_call.1} parent=1 // loop_pre_header
      _
    $region3: #{tpu_custom_call.1} parent=1 // loop_header
      %s24 = sphi 0, %s28
      %p25 = scmp.ge.s32.totalorder %s24, 6
      %s31 = sphi 0, %s43
      %s32 = sphi 0, %s39
      %s33 = sphi 0, %s31
      %s34 = sphi 0, %s32
      %s35 = sphi 0, %s33
      %s36 = sphi 0, %s34
      %s48 = sphi 0, %s50
      %s51 = sphi 0, %s48
      %s52 = sphi 0, %s51
      %s68 = sphi 0, %s52
      %s74 = sphi 0, %s76
      %s77 = sphi 0, %s74
      %s78 = sphi 0, %s77
      %s94 = sphi 0, %s78
      %s98 = sphi 0, %s98
      %s100 = sphi 0, %s98
      %s101 = sphi 0, %s100
      %s115 = sphi 0, %s101
      %s119 = sphi 0, %s119
      %s121 = sphi 0, %s119
      %s122 = sphi 0, %s121
      %s136 = sphi 0, %s122
      %s140 = sphi 0, %s140
      %s142 = sphi 0, %s140
      %s143 = sphi 0, %s142
      %s157 = sphi 0, %s143
      %s161 = sphi 0, %s161
      %s163 = sphi 0, %s161
      %s164 = sphi 0, %s163
      %s178 = sphi 0, %s164
      %s182 = sphi 0, %s182
      %s184 = sphi 0, %s182
      %s185 = sphi 0, %s184
      %s199 = sphi 0, %s185
      %s203 = sphi 0, %s203
      %s205 = sphi 0, %s203
      %s206 = sphi 0, %s205
      %s220 = sphi 0, %s206
      %s228 = sphi 0, %s230
      %s231 = sphi 0, %s228
      %s232 = sphi 0, %s231
      %s248 = sphi 0, %s232
    $region4: #{tpu_custom_call.1} parent=1 // loop_header_branch
      %27 = sbr.rel (%p25) target = $region8
    $region5: #{tpu_custom_call.1} parent=1 // loop_body
      %s29 = ssub.s32 %s24, 1
      %s30 = ssub.s32 %s24, 2
      %s37 = sadd.s32 1, %s32
      %p38 = scmp.ge.s32.totalorder %s37, 2
      %s39 = scalar_select %p38, 0, %s37
      %s40 = sadd.s32 1, %s31
      %s41 = scalar_select %p38, %s40, %s31
      %p42 = scmp.ge.s32.totalorder %s41, 2
      %s43 = scalar_select %p42, 0, %s41
      %s44 = ssub.s32 %s31, %s43
      %s45 = ssub.s32 %s32, %s39
      %s46 = sor.u32 %s44, %s45
      %p47 = scmp.eq.s32.totalorder %s46, 0
      %s49 = sadd.s32 %s48, 1
      %s50 = scalar_select %p47, %s48, %s49
      %p53 = pneg %p47
      %p54 = scmp.eq.s32.totalorder %s24, 3
      %p55 = por %p53, %p54
      %p56 = scmp.ne.s32.totalorder %s48, %s51
      %p57 = scmp.eq.s32.totalorder %s24, 0
      %p58 = por %p56, %p57
      %p59 = scmp.ne.s32.totalorder %s48, %s51
      %p60 = scmp.eq.s32.totalorder %s29, 3
      %p61 = por %p59, %p60
      %p62 = scmp.ne.s32.totalorder %s51, %s52
      %p63 = scmp.eq.s32.totalorder %s29, 0
      %p64 = por %p62, %p63
      %p65 = scmp.ne.s32.totalorder %s51, %s52
      %p66 = scmp.eq.s32.totalorder %s30, 3
      %p67 = por %p65, %p66
      %p69 = scmp.ne.s32.totalorder %s52, %s68
      %p70 = scmp.eq.s32.totalorder %s30, 0
      %p71 = por %p69, %p70
      %s72 = ssub.s32 %s31, %s43
      %p73 = scmp.eq.s32.totalorder %s72, 0
      %s75 = sadd.s32 %s74, 1
      %s76 = scalar_select %p73, %s74, %s75
      %p79 = pneg %p73
      %p80 = scmp.eq.s32.totalorder %s24, 3
      %p81 = por %p79, %p80
      %p82 = scmp.ne.s32.totalorder %s74, %s77
      %p83 = scmp.eq.s32.totalorder %s24, 0
      %p84 = por %p82, %p83
      %p85 = scmp.ne.s32.totalorder %s74, %s77
      %p86 = scmp.eq.s32.totalorder %s29, 3
      %p87 = por %p85, %p86
      %p88 = scmp.ne.s32.totalorder %s77, %s78
      %p89 = scmp.eq.s32.totalorder %s29, 0
      %p90 = por %p88, %p89
      %p91 = scmp.ne.s32.totalorder %s77, %s78
      %p92 = scmp.eq.s32.totalorder %s30, 3
      %p93 = por %p91, %p92
      %p95 = scmp.ne.s32.totalorder %s78, %s94
      %p96 = scmp.eq.s32.totalorder %s30, 0
      %p97 = por %p95, %p96
      %s99 = sadd.s32 %s98, 1
      %p102 = scmp.eq.s32.totalorder %s24, 3
      %p103 = scmp.ne.s32.totalorder %s98, %s100
      %p104 = scmp.eq.s32.totalorder %s24, 0
      %p105 = por %p103, %p104
      %p106 = scmp.ne.s32.totalorder %s98, %s100
      %p107 = scmp.eq.s32.totalorder %s29, 3
      %p108 = por %p106, %p107
      %p109 = scmp.ne.s32.totalorder %s100, %s101
      %p110 = scmp.eq.s32.totalorder %s29, 0
      %p111 = por %p109, %p110
      %p112 = scmp.ne.s32.totalorder %s100, %s101
      %p113 = scmp.eq.s32.totalorder %s30, 3
      %p114 = por %p112, %p113
      %p116 = scmp.ne.s32.totalorder %s101, %s115
      %p117 = scmp.eq.s32.totalorder %s30, 0
      %p118 = por %p116, %p117
      %s120 = sadd.s32 %s119, 1
      %p123 = scmp.eq.s32.totalorder %s24, 3
      %p124 = scmp.ne.s32.totalorder %s119, %s121
      %p125 = scmp.eq.s32.totalorder %s24, 0
      %p126 = por %p124, %p125
      %p127 = scmp.ne.s32.totalorder %s119, %s121
      %p128 = scmp.eq.s32.totalorder %s29, 3
      %p129 = por %p127, %p128
      %p130 = scmp.ne.s32.totalorder %s121, %s122
      %p131 = scmp.eq.s32.totalorder %s29, 0
      %p132 = por %p130, %p131
      %p133 = scmp.ne.s32.totalorder %s121, %s122
      %p134 = scmp.eq.s32.totalorder %s30, 3
      %p135 = por %p133, %p134
      %p137 = scmp.ne.s32.totalorder %s122, %s136
      %p138 = scmp.eq.s32.totalorder %s30, 0
      %p139 = por %p137, %p138
      %s141 = sadd.s32 %s140, 1
      %p144 = scmp.eq.s32.totalorder %s24, 3
      %p145 = scmp.ne.s32.totalorder %s140, %s142
      %p146 = scmp.eq.s32.totalorder %s24, 0
      %p147 = por %p145, %p146
      %p148 = scmp.ne.s32.totalorder %s140, %s142
      %p149 = scmp.eq.s32.totalorder %s29, 3
      %p150 = por %p148, %p149
      %p151 = scmp.ne.s32.totalorder %s142, %s143
      %p152 = scmp.eq.s32.totalorder %s29, 0
      %p153 = por %p151, %p152
      %p154 = scmp.ne.s32.totalorder %s142, %s143
      %p155 = scmp.eq.s32.totalorder %s30, 3
      %p156 = por %p154, %p155
      %p158 = scmp.ne.s32.totalorder %s143, %s157
      %p159 = scmp.eq.s32.totalorder %s30, 0
      %p160 = por %p158, %p159
      %s162 = sadd.s32 %s161, 1
      %p165 = scmp.eq.s32.totalorder %s24, 3
      %p166 = scmp.ne.s32.totalorder %s161, %s163
      %p167 = scmp.eq.s32.totalorder %s24, 0
      %p168 = por %p166, %p167
      %p169 = scmp.ne.s32.totalorder %s161, %s163
      %p170 = scmp.eq.s32.totalorder %s29, 3
      %p171 = por %p169, %p170
      %p172 = scmp.ne.s32.totalorder %s163, %s164
      %p173 = scmp.eq.s32.totalorder %s29, 0
      %p174 = por %p172, %p173
      %p175 = scmp.ne.s32.totalorder %s163, %s164
      %p176 = scmp.eq.s32.totalorder %s30, 3
      %p177 = por %p175, %p176
      %p179 = scmp.ne.s32.totalorder %s164, %s178
      %p180 = scmp.eq.s32.totalorder %s30, 0
      %p181 = por %p179, %p180
      %s183 = sadd.s32 %s182, 1
      %p186 = scmp.eq.s32.totalorder %s24, 3
      %p187 = scmp.ne.s32.totalorder %s182, %s184
      %p188 = scmp.eq.s32.totalorder %s24, 0
      %p189 = por %p187, %p188
      %p190 = scmp.ne.s32.totalorder %s182, %s184
      %p191 = scmp.eq.s32.totalorder %s29, 3
      %p192 = por %p190, %p191
      %p193 = scmp.ne.s32.totalorder %s184, %s185
      %p194 = scmp.eq.s32.totalorder %s29, 0
      %p195 = por %p193, %p194
      %p196 = scmp.ne.s32.totalorder %s184, %s185
      %p197 = scmp.eq.s32.totalorder %s30, 3
      %p198 = por %p196, %p197
      %p200 = scmp.ne.s32.totalorder %s185, %s199
      %p201 = scmp.eq.s32.totalorder %s30, 0
      %p202 = por %p200, %p201
      %s204 = sadd.s32 %s203, 1
      %p207 = scmp.eq.s32.totalorder %s24, 3
      %p208 = scmp.ne.s32.totalorder %s203, %s205
      %p209 = scmp.eq.s32.totalorder %s24, 0
      %p210 = por %p208, %p209
      %p211 = scmp.ne.s32.totalorder %s203, %s205
      %p212 = scmp.eq.s32.totalorder %s29, 3
      %p213 = por %p211, %p212
      %p214 = scmp.ne.s32.totalorder %s205, %s206
      %p215 = scmp.eq.s32.totalorder %s29, 0
      %p216 = por %p214, %p215
      %p217 = scmp.ne.s32.totalorder %s205, %s206
      %p218 = scmp.eq.s32.totalorder %s30, 3
      %p219 = por %p217, %p218
      %p221 = scmp.ne.s32.totalorder %s206, %s220
      %p222 = scmp.eq.s32.totalorder %s30, 0
      %p223 = por %p221, %p222
      %s224 = ssub.s32 %s31, %s43
      %s225 = ssub.s32 %s32, %s39
      %s226 = sor.u32 %s224, %s225
      %p227 = scmp.eq.s32.totalorder %s226, 0
      %s229 = sadd.s32 %s228, 1
      %s230 = scalar_select %p227, %s228, %s229
      %p233 = pneg %p227
      %p234 = scmp.eq.s32.totalorder %s24, 3
      %p235 = por %p233, %p234
      %p236 = scmp.ne.s32.totalorder %s228, %s231
      %p237 = scmp.eq.s32.totalorder %s24, 0
      %p238 = por %p236, %p237
      %p239 = scmp.ne.s32.totalorder %s228, %s231
      %p240 = scmp.eq.s32.totalorder %s29, 3
      %p241 = por %p239, %p240
      %p242 = scmp.ne.s32.totalorder %s231, %s232
      %p243 = scmp.eq.s32.totalorder %s29, 0
      %p244 = por %p242, %p243
      %p245 = scmp.ne.s32.totalorder %s231, %s232
      %p246 = scmp.eq.s32.totalorder %s30, 3
      %p247 = por %p245, %p246
      %p249 = scmp.ne.s32.totalorder %s232, %s248
      %p250 = scmp.eq.s32.totalorder %s30, 0
      %p251 = por %p249, %p250
      %p252 = scmp.le.s32.totalorder 1, %s24
      %p253 = scmp.lt.s32.totalorder %s24, 5
      %p254 = pnand %p252, %p253
      %p255 = pneg %p254
      // Predicated region
      $region9: #{tpu_custom_call.1} parent=5 // pred_check
        _
      $region10: #{tpu_custom_call.1} parent=5 // pred_check_branch
        %257 = sbr.rel (%p254) target = $region12
      $region11: #{tpu_custom_call.1} parent=5 // pred_region
        %s258 = ssub.s32 %s24, 1
        // Predicated region
        $region13: #{tpu_custom_call.1} parent=11 // pred_check
          %p259 = pneg %p111
        $region14: #{tpu_custom_call.1} parent=11 // pred_check_branch
          %261 = sbr.rel (%p259) target = $region16
        $region15: #{tpu_custom_call.1} parent=11 // pred_region
          %s263 = ssub.s32 1024, 1024
          %264 = vsyncadd [#allocation8], %s263
          %s265 = sshll.u32 [#allocation9], 4
          %s266 = int_to_ptr.vmem [resolvable:$true] %s265
          %271 = dma.hbm_to_vmem [thread:$0]  %s2, 1024, %s266, [#allocation8], 64, 64, 4
        $region16: #{tpu_custom_call.1} parent=11 // pred_fallthru
          _
        // Predicated region
        $region17: #{tpu_custom_call.1} parent=11 // pred_check
          %p272 = pneg %p132
        $region18: #{tpu_custom_call.1} parent=11 // pred_check_branch
          %274 = sbr.rel (%p272) target = $region20
        $region19: #{tpu_custom_call.1} parent=11 // pred_region
          _
        $region20: #{tpu_custom_call.1} parent=11 // pred_fallthru
          _
        // Predicated region
        $region21: #{tpu_custom_call.1} parent=11 // pred_check
          %p275 = pneg %p153
        $region22: #{tpu_custom_call.1} parent=11 // pred_check_branch
          %277 = sbr.rel (%p275) target = $region24
        $region23: #{tpu_custom_call.1} parent=11 // pred_region
          %s279 = ssub.s32 2048, 2048
          %280 = vsyncadd [#allocation11], %s279
          %s281 = sshll.u32 [#allocation10], 4
          %s282 = int_to_ptr.vmem [resolvable:$true] %s281
          %287 = dma.hbm_to_vmem [thread:$0]  %s4, 2048, %s282, [#allocation11], 128, 128, 8
        $region24: #{tpu_custom_call.1} parent=11 // pred_fallthru
          _
        // Predicated region
        $region25: #{tpu_custom_call.1} parent=11 // pred_check
          %p288 = pneg %p174
        $region26: #{tpu_custom_call.1} parent=11 // pred_check_branch
          %290 = sbr.rel (%p288) target = $region28
        $region27: #{tpu_custom_call.1} parent=11 // pred_region
          _
        $region28: #{tpu_custom_call.1} parent=11 // pred_fallthru
          _
        // Predicated region
        $region29: #{tpu_custom_call.1} parent=11 // pred_check
          %p291 = pneg %p195
        $region30: #{tpu_custom_call.1} parent=11 // pred_check_branch
          %293 = sbr.rel (%p291) target = $region32
        $region31: #{tpu_custom_call.1} parent=11 // pred_region
          %s295 = ssub.s32 1024, 1024
          %296 = vsyncadd [#allocation11], %s295
          %s297 = sshll.u32 [#allocation12], 4
          %s298 = int_to_ptr.vmem [resolvable:$true] %s297
          %303 = dma.hbm_to_vmem [thread:$0]  %s6, 1024, %s298, [#allocation11], 64, 64, 4
        $region32: #{tpu_custom_call.1} parent=11 // pred_fallthru
          _
        // Predicated region
        $region33: #{tpu_custom_call.1} parent=11 // pred_check
          %p304 = pneg %p216
        $region34: #{tpu_custom_call.1} parent=11 // pred_check_branch
          %306 = sbr.rel (%p304) target = $region36
        $region35: #{tpu_custom_call.1} parent=11 // pred_region
          _
        $region36: #{tpu_custom_call.1} parent=11 // pred_fallthru
          _
      $region12: #{tpu_custom_call.1} parent=5 // pred_fallthru
        _
      %p307 = scmp.lt.s32.totalorder %s24, 4
      // Predicated region
      $region37: #{tpu_custom_call.1} parent=5 // pred_check
        %p308 = pneg %p307
      $region38: #{tpu_custom_call.1} parent=5 // pred_check_branch
        %310 = sbr.rel (%p308) target = $region40
      $region39: #{tpu_custom_call.1} parent=5 // pred_region
        // Predicated region
        $region41: #{tpu_custom_call.1} parent=39 // pred_check
          %p311 = pneg %p58
        $region42: #{tpu_custom_call.1} parent=39 // pred_check_branch
          %313 = sbr.rel (%p311) target = $region44
        $region43: #{tpu_custom_call.1} parent=39 // pred_region
          %s314 = sand.u32 %s48, 1
          %s315 = scalar_lea.sflag [#allocation5], %s314
          %s316 = sand.u32 %s48, 1
          %s317 = smul.addr %s316, 128
          %s318 = scalar_lea.vmem [#allocation4], %s317
          %s319 = smul.u32 16, %s32
          %s321 = ssub.s32 2048, 2048
          %322 = vsyncadd %s315, %s321
          %s323 = smul.addr %s31, 32
          %s324 = sadd.s32 %s319, %s323
          %s325 = smul.addr %s324, 128
          %s326 = scalar_lea.hbm %s0, %s325
          %s327 = sshll.u32 %s318, 4
          %s328 = int_to_ptr.vmem [resolvable:$true] %s327
          %333 = dma.hbm_to_vmem [thread:$0]  %s326, 2048, %s328, %s315, 128, 128, 8
        $region44: #{tpu_custom_call.1} parent=39 // pred_fallthru
          _
        // Predicated region
        $region45: #{tpu_custom_call.1} parent=39 // pred_check
          %p334 = pneg %p84
        $region46: #{tpu_custom_call.1} parent=39 // pred_check_branch
          %336 = sbr.rel (%p334) target = $region48
        $region47: #{tpu_custom_call.1} parent=39 // pred_region
          %s337 = sand.u32 %s24, 1
          %s338 = scalar_lea.sflag [#allocation8], %s337
          %s339 = sand.u32 %s74, 1
          %s340 = smul.addr %s339, 128
          %s341 = scalar_lea.vmem [#allocation7], %s340
          %s343 = ssub.s32 2048, 2048
          %344 = vsyncadd %s338, %s343
          %s345 = smul.addr %s31, 32
          %s346 = smul.addr %s345, 64
          %s347 = scalar_lea.hbm %s1, %s346
          %s348 = sshll.u32 %s341, 4
          %s349 = int_to_ptr.vmem [resolvable:$true] %s348
          %354 = dma.hbm_to_vmem [thread:$0]  %s347, 2048, %s349, %s338, 64, 64, 4
        $region48: #{tpu_custom_call.1} parent=39 // pred_fallthru
          _
      $region40: #{tpu_custom_call.1} parent=5 // pred_fallthru
        _
      %p355 = scmp.le.s32.totalorder 1, %s24
      %p356 = scmp.lt.s32.totalorder %s24, 5
      %p357 = pnand %p355, %p356
      %p358 = pneg %p357
      // Predicated region
      $region49: #{tpu_custom_call.1} parent=5 // pred_check
        _
      $region50: #{tpu_custom_call.1} parent=5 // pred_check_branch
        %360 = sbr.rel (%p357) target = $region52
      $region51: #{tpu_custom_call.1} parent=5 // pred_region
        %s361 = ssub.s32 %s24, 1
        %s362 = sand.u32 %s51, 1
        %s363 = scalar_lea.sflag [#allocation5], %s362
        %s364 = sand.u32 %s51, 1
        %s365 = smul.addr %s364, 128
        %s366 = scalar_lea.vmem [#allocation4], %s365
        // Predicated region
        $region53: #{tpu_custom_call.1} parent=51 // pred_check
          %p367 = pneg %p64
        $region54: #{tpu_custom_call.1} parent=51 // pred_check_branch
          %369 = sbr.rel (%p367) target = $region56
        $region55: #{tpu_custom_call.1} parent=51 // pred_region
          %370 = dma.done %s363, 2048
        $region56: #{tpu_custom_call.1} parent=51 // pred_fallthru
          _
        %s371 = sand.u32 %s29, 1
        %s372 = scalar_lea.sflag [#allocation8], %s371
        %s373 = sand.u32 %s77, 1
        %s374 = smul.addr %s373, 128
        %s375 = scalar_lea.vmem [#allocation7], %s374
        // Predicated region
        $region57: #{tpu_custom_call.1} parent=51 // pred_check
          %p376 = pneg %p90
        $region58: #{tpu_custom_call.1} parent=51 // pred_check_branch
          %378 = sbr.rel (%p376) target = $region60
        $region59: #{tpu_custom_call.1} parent=51 // pred_region
          %379 = dma.done %s372, 2048
        $region60: #{tpu_custom_call.1} parent=51 // pred_fallthru
          _
        // Predicated region
        $region61: #{tpu_custom_call.1} parent=51 // pred_check
          %p380 = pneg %p111
        $region62: #{tpu_custom_call.1} parent=51 // pred_check_branch
          %382 = sbr.rel (%p380) target = $region64
        $region63: #{tpu_custom_call.1} parent=51 // pred_region
          %383 = dma.done [#allocation8], 1024
        $region64: #{tpu_custom_call.1} parent=51 // pred_fallthru
          _
        // Predicated region
        $region65: #{tpu_custom_call.1} parent=51 // pred_check
          %p384 = pneg %p153
        $region66: #{tpu_custom_call.1} parent=51 // pred_check_branch
          %386 = sbr.rel (%p384) target = $region68
        $region67: #{tpu_custom_call.1} parent=51 // pred_region
          %387 = dma.done [#allocation11], 2048
        $region68: #{tpu_custom_call.1} parent=51 // pred_fallthru
          _
        // Predicated region
        $region69: #{tpu_custom_call.1} parent=51 // pred_check
          %p388 = pneg %p195
        $region70: #{tpu_custom_call.1} parent=51 // pred_check_branch
          %390 = sbr.rel (%p388) target = $region72
        $region71: #{tpu_custom_call.1} parent=51 // pred_region
          %391 = dma.done [#allocation11], 1024
        $region72: #{tpu_custom_call.1} parent=51 // pred_fallthru
          _
        %s392 = sand.u32 %s51, 1
        %s393 = scalar_lea.sflag [#allocation5], %s392
        %s394 = sand.u32 %s51, 1
        %s395 = smul.addr %s394, 128
        %s396 = scalar_lea.vmem [#allocation4], %s395
        %p397 = pneg %p64
        %p398 = pneg %p61
        %s399 = sand.u32 %s29, 1
        %s400 = scalar_lea.sflag [#allocation8], %s399
        %s401 = sand.u32 %s77, 1
        %s402 = smul.addr %s401, 128
        %s403 = scalar_lea.vmem [#allocation7], %s402
        %p404 = pneg %p90
        %p405 = pneg %p87
        %p406 = pneg %p111
        %p407 = pneg %p108
        %p408 = pneg %p132
        %p409 = pneg %p129
        %p410 = pneg %p153
        %p411 = pneg %p150
        %p412 = pneg %p174
        %p413 = pneg %p171
        %p414 = pneg %p195
        %p415 = pneg %p192
        %p416 = pneg %p216
        %p417 = pneg %p213
        %p418 = pneg %p244
        %p419 = pneg %p241
        %s420 = sand.u32 %s231, 1
        %s421 = scalar_lea.sflag [#allocation6], %s420
        %s422 = sand.u32 %s231, 1
        %s423 = smul.addr %s422, 128
        %s424 = scalar_lea.vmem [#allocation13], %s423
        %s425 = smul.u32 16, %s34
        %s426 = smul.u32 16, %s34
        %p428 = scmp.eq.s32.totalorder %s34, 0
        // Predicated region
        $region73: #{tpu_custom_call.1} parent=51 // pred_check
          %p429 = pneg %p428
        $region74: #{tpu_custom_call.1} parent=51 // pred_check_branch
          %431 = sbr.rel (%p429) target = $region76
        $region75: #{tpu_custom_call.1} parent=51 // pred_region
          %v432 = vld [vmem:[#allocation10] sm:$0xff]
          %v433 = vld [vmem:[#allocation10 + $0x8] sm:$0xff]
          %v434 = vld [vmem:[#allocation10 + $0x10] sm:$0xff]
          %v435 = vld [vmem:[#allocation10 + $0x18] sm:$0xff]
          %v436 = vld [vmem:[#allocation10 + $0x20] sm:$0xff]
          %v437 = vld [vmem:[#allocation10 + $0x28] sm:$0xff]
          %v438 = vld [vmem:[#allocation10 + $0x30] sm:$0xff]
          %v439 = vld [vmem:[#allocation10 + $0x38] sm:$0xff]
          %v440 = vld [vmem:[#allocation10 + $0x40] sm:$0xff]
          %v441 = vld [vmem:[#allocation10 + $0x48] sm:$0xff]
          %v442 = vld [vmem:[#allocation10 + $0x50] sm:$0xff]
          %v443 = vld [vmem:[#allocation10 + $0x58] sm:$0xff]
          %v444 = vld [vmem:[#allocation10 + $0x60] sm:$0xff]
          %v445 = vld [vmem:[#allocation10 + $0x68] sm:$0xff]
          %v446 = vld [vmem:[#allocation10 + $0x70] sm:$0xff]
          %v447 = vld [vmem:[#allocation10 + $0x78] sm:$0xff]
          %v448 = vld [vmem:[%s375] sm:$0xf]
          %v449 = vld [vmem:[%s375 + $0x4] sm:$0xf]
          %v450 = vld [vmem:[%s375 + $0x8] sm:$0xf]
          %v451 = vld [vmem:[%s375 + $0xc] sm:$0xf]
          %v452 = vld [vmem:[%s375 + $0x10] sm:$0xf]
          %v453 = vld [vmem:[%s375 + $0x14] sm:$0xf]
          %v454 = vld [vmem:[%s375 + $0x18] sm:$0xf]
          %v455 = vld [vmem:[%s375 + $0x1c] sm:$0xf]
          %v464 = vunpack.c.l.b16 %v448
          %v465 = vunpack.c.l.b16 %v449
          %v466 = vunpack.c.l.b16 %v450
          %v467 = vunpack.c.l.b16 %v451
          %v468 = vunpack.c.l.b16 %v452
          %v469 = vunpack.c.l.b16 %v453
          %v470 = vunpack.c.l.b16 %v454
          %v471 = vunpack.c.l.b16 %v455
          %v472 = vpack.c.b16 %v465, %v464
          %v473 = vpack.c.b16 %v467, %v466
          %v474 = vpack.c.b16 %v469, %v468
          %v475 = vpack.c.b16 %v471, %v470
          %v496 = vunpack.c.l.b16 %v432
          %v497 = vunpack.c.h.b16 %v432
          %v498 = vunpack.c.l.b16 %v433
          %v499 = vunpack.c.h.b16 %v433
          %v500 = vunpack.c.l.b16 %v434
          %v501 = vunpack.c.h.b16 %v434
          %v502 = vunpack.c.l.b16 %v435
          %v503 = vunpack.c.h.b16 %v435
          %v504 = vunpack.c.l.b16 %v436
          %v505 = vunpack.c.h.b16 %v436
          %v506 = vunpack.c.l.b16 %v437
          %v507 = vunpack.c.h.b16 %v437
          %v508 = vunpack.c.l.b16 %v438
          %v509 = vunpack.c.h.b16 %v438
          %v510 = vunpack.c.l.b16 %v439
          %v511 = vunpack.c.h.b16 %v439
          %v512 = vunpack.c.l.b16 %v440
          %v513 = vunpack.c.h.b16 %v440
          %v514 = vunpack.c.l.b16 %v441
          %v515 = vunpack.c.h.b16 %v441
          %v516 = vunpack.c.l.b16 %v442
          %v517 = vunpack.c.h.b16 %v442
          %v518 = vunpack.c.l.b16 %v443
          %v519 = vunpack.c.h.b16 %v443
          %v520 = vunpack.c.l.b16 %v444
          %v521 = vunpack.c.h.b16 %v444
          %v522 = vunpack.c.l.b16 %v445
          %v523 = vunpack.c.h.b16 %v445
          %v524 = vunpack.c.l.b16 %v446
          %v525 = vunpack.c.h.b16 %v446
          %v526 = vunpack.c.l.b16 %v447
          %v527 = vunpack.c.h.b16 %v447
          %v528 = vpack.c.b16 %v498, %v496
          %v529 = vpack.c.b16 %v499, %v497
          %v530 = vpack.c.b16 %v502, %v500
          %v531 = vpack.c.b16 %v503, %v501
          %v532 = vpack.c.b16 %v506, %v504
          %v533 = vpack.c.b16 %v507, %v505
          %v534 = vpack.c.b16 %v510, %v508
          %v535 = vpack.c.b16 %v511, %v509
          %v536 = vpack.c.b16 %v514, %v512
          %v537 = vpack.c.b16 %v515, %v513
          %v538 = vpack.c.b16 %v518, %v516
          %v539 = vpack.c.b16 %v519, %v517
          %v540 = vpack.c.b16 %v522, %v520
          %v541 = vpack.c.b16 %v523, %v521
          %v542 = vpack.c.b16 %v526, %v524
          %v543 = vpack.c.b16 %v527, %v525
          %560 = vmatprep.subr.bf16.mxu0 %v543
          %561 = vmatpush1.bf16.msra.mxu0 %v542
          %562 = vmatprep.subr.bf16.mxu0 %v541
          %563 = vmatpush1.bf16.msra.mxu0 %v540
          %564 = vmatprep.subr.bf16.mxu0 %v539
          %565 = vmatpush1.bf16.msra.mxu0 %v538
          %566 = vmatprep.subr.bf16.mxu0 %v537
          %567 = vmatpush1.bf16.msra.mxu0 %v536
          %568 = vmatprep.subr.bf16.mxu0 %v535
          %569 = vmatpush1.bf16.msra.mxu0 %v534
          %570 = vmatprep.subr.bf16.mxu0 %v533
          %571 = vmatpush1.bf16.msra.mxu0 %v532
          %572 = vmatprep.subr.bf16.mxu0 %v531
          %573 = vmatpush1.bf16.msra.mxu0 %v530
          %574 = vmatprep.subr.bf16.mxu0 %v529
          %575 = vmatpush1.bf16.msra.mxu0 %v528
          %576 = vmatprep.subr.bf16.mxu0 0
          %577 = vmatpush2.bf16.msra.mxu0 0
          %578 = vmatprep.subr.bf16.mxu0 0
          %579 = vmatpush2.bf16.msra.mxu0 0
          %580 = vmatprep.subr.bf16.mxu0 0
          %581 = vmatpush2.bf16.msra.mxu0 0
          %582 = vmatprep.subr.bf16.mxu0 0
          %583 = vmatpush2.bf16.msra.mxu0 0
          %584 = vmatprep.subr.bf16.mxu0 0
          %585 = vmatpush2.bf16.msra.mxu0 0
          %586 = vmatprep.subr.bf16.mxu0 0
          %587 = vmatpush2.bf16.msra.mxu0 0
          %588 = vmatprep.subr.bf16.mxu0 0
          %589 = vmatpush2.bf16.msra.mxu0 0
          %590 = vmatprep.subr.bf16.mxu0 0
          %591 = vmatpush2.bf16.msra.mxu0 0
          %592 = vmatprep.mubr.bf16.mxu0 0
          %593 = vmatmul.mubr.bf16.gmra.mxu0 %v472
          %v594 = vpop.f32.mrf.mxu0
          %v595 = vadd.f32 0.0, %v594
          %v596 = vpop.f32.mrf.mxu0
          %v597 = vadd.f32 0.0, %v596
          %v598 = vpop.f32.mrf.mxu0
          %v599 = vadd.f32 0.0, %v598
          %v600 = vpop.f32.mrf.mxu0
          %v601 = vadd.f32 0.0, %v600
          %602 = vmatprep.mubr.bf16.mxu0 0
          %603 = vmatmul.mubr.bf16.gmra.mxu0 %v473
          %v604 = vpop.f32.mrf.mxu0
          %v605 = vadd.f32 0.0, %v604
          %v606 = vpop.f32.mrf.mxu0
          %v607 = vadd.f32 0.0, %v606
          %v608 = vpop.f32.mrf.mxu0
          %v609 = vadd.f32 0.0, %v608
          %v610 = vpop.f32.mrf.mxu0
          %v611 = vadd.f32 0.0, %v610
          %612 = vmatprep.mubr.bf16.mxu0 0
          %613 = vmatmul.mubr.bf16.gmra.mxu0 %v474
          %v614 = vpop.f32.mrf.mxu0
          %v615 = vadd.f32 0.0, %v614
          %v616 = vpop.f32.mrf.mxu0
          %v617 = vadd.f32 0.0, %v616
          %v618 = vpop.f32.mrf.mxu0
          %v619 = vadd.f32 0.0, %v618
          %v620 = vpop.f32.mrf.mxu0
          %v621 = vadd.f32 0.0, %v620
          %622 = vmatprep.mubr.bf16.mxu0 0
          %623 = vmatmul.mubr.bf16.gmra.mxu0 %v475
          %v624 = vpop.f32.mrf.mxu0
          %v625 = vadd.f32 0.0, %v624
          %v626 = vpop.f32.mrf.mxu0
          %v627 = vadd.f32 0.0, %v626
          %v628 = vpop.f32.mrf.mxu0
          %v629 = vadd.f32 0.0, %v628
          %v630 = vpop.f32.mrf.mxu0
          %v631 = vadd.f32 0.0, %v630
          %632 = vdwg.mxu0
          %s633 = scalar_lea.vmem %s375, 32 [#allocation7]
          %v634 = vld [vmem:[%s633] sm:$0xf]
          %v635 = vld [vmem:[%s633 + $0x4] sm:$0xf]
          %v636 = vld [vmem:[%s633 + $0x8] sm:$0xf]
          %v637 = vld [vmem:[%s633 + $0xc] sm:$0xf]
          %v638 = vld [vmem:[%s633 + $0x10] sm:$0xf]
          %v639 = vld [vmem:[%s633 + $0x14] sm:$0xf]
          %v640 = vld [vmem:[%s633 + $0x18] sm:$0xf]
          %v641 = vld [vmem:[%s633 + $0x1c] sm:$0xf]
          %v650 = vunpack.c.l.b16 %v634
          %v651 = vunpack.c.l.b16 %v635
          %v652 = vunpack.c.l.b16 %v636
          %v653 = vunpack.c.l.b16 %v637
          %v654 = vunpack.c.l.b16 %v638
          %v655 = vunpack.c.l.b16 %v639
          %v656 = vunpack.c.l.b16 %v640
          %v657 = vunpack.c.l.b16 %v641
          %v658 = vpack.c.b16 %v651, %v650
          %v659 = vpack.c.b16 %v653, %v652
          %v660 = vpack.c.b16 %v655, %v654
          %v661 = vpack.c.b16 %v657, %v656
          %666 = vmatprep.subr.bf16.mxu0 %v543
          %667 = vmatpush1.bf16.msra.mxu0 %v542
          %668 = vmatprep.subr.bf16.mxu0 %v541
          %669 = vmatpush1.bf16.msra.mxu0 %v540
          %670 = vmatprep.subr.bf16.mxu0 %v539
          %671 = vmatpush1.bf16.msra.mxu0 %v538
          %672 = vmatprep.subr.bf16.mxu0 %v537
          %673 = vmatpush1.bf16.msra.mxu0 %v536
          %674 = vmatprep.subr.bf16.mxu0 %v535
          %675 = vmatpush1.bf16.msra.mxu0 %v534
          %676 = vmatprep.subr.bf16.mxu0 %v533
          %677 = vmatpush1.bf16.msra.mxu0 %v532
          %678 = vmatprep.subr.bf16.mxu0 %v531
          %679 = vmatpush1.bf16.msra.mxu0 %v530
          %680 = vmatprep.subr.bf16.mxu0 %v529
          %681 = vmatpush1.bf16.msra.mxu0 %v528
          %682 = vmatprep.subr.bf16.mxu0 0
          %683 = vmatpush2.bf16.msra.mxu0 0
          %684 = vmatprep.subr.bf16.mxu0 0
          %685 = vmatpush2.bf16.msra.mxu0 0
          %686 = vmatprep.subr.bf16.mxu0 0
          %687 = vmatpush2.bf16.msra.mxu0 0
          %688 = vmatprep.subr.bf16.mxu0 0
          %689 = vmatpush2.bf16.msra.mxu0 0
          %690 = vmatprep.subr.bf16.mxu0 0
          %691 = vmatpush2.bf16.msra.mxu0 0
          %692 = vmatprep.subr.bf16.mxu0 0
          %693 = vmatpush2.bf16.msra.mxu0 0
          %694 = vmatprep.subr.bf16.mxu0 0
          %695 = vmatpush2.bf16.msra.mxu0 0
          %696 = vmatprep.subr.bf16.mxu0 0
          %697 = vmatpush2.bf16.msra.mxu0 0
          %698 = vmatprep.mubr.bf16.mxu0 0
          %699 = vmatmul.mubr.bf16.gmra.mxu0 %v658
          %v700 = vpop.f32.mrf.mxu0
          %v701 = vadd.f32 0.0, %v700
          %v702 = vpop.f32.mrf.mxu0
          %v703 = vadd.f32 0.0, %v702
          %v704 = vpop.f32.mrf.mxu0
          %v705 = vadd.f32 0.0, %v704
          %v706 = vpop.f32.mrf.mxu0
          %v707 = vadd.f32 0.0, %v706
          %708 = vmatprep.mubr.bf16.mxu0 0
          %709 = vmatmul.mubr.bf16.gmra.mxu0 %v659
          %v710 = vpop.f32.mrf.mxu0
          %v711 = vadd.f32 0.0, %v710
          %v712 = vpop.f32.mrf.mxu0
          %v713 = vadd.f32 0.0, %v712
          %v714 = vpop.f32.mrf.mxu0
          %v715 = vadd.f32 0.0, %v714
          %v716 = vpop.f32.mrf.mxu0
          %v717 = vadd.f32 0.0, %v716
          %718 = vmatprep.mubr.bf16.mxu0 0
          %719 = vmatmul.mubr.bf16.gmra.mxu0 %v660
          %v720 = vpop.f32.mrf.mxu0
          %v721 = vadd.f32 0.0, %v720
          %v722 = vpop.f32.mrf.mxu0
          %v723 = vadd.f32 0.0, %v722
          %v724 = vpop.f32.mrf.mxu0
          %v725 = vadd.f32 0.0, %v724
          %v726 = vpop.f32.mrf.mxu0
          %v727 = vadd.f32 0.0, %v726
          %728 = vmatprep.mubr.bf16.mxu0 0
          %729 = vmatmul.mubr.bf16.gmra.mxu0 %v661
          %v730 = vpop.f32.mrf.mxu0
          %v731 = vadd.f32 0.0, %v730
          %v732 = vpop.f32.mrf.mxu0
          %v733 = vadd.f32 0.0, %v732
          %v734 = vpop.f32.mrf.mxu0
          %v735 = vadd.f32 0.0, %v734
          %v736 = vpop.f32.mrf.mxu0
          %v737 = vadd.f32 0.0, %v736
          %738 = vdwg.mxu0
          %v739 = vmax.f32 %v595, %v701
          %v740 = vmax.f32 %v597, %v703
          %v741 = vmax.f32 %v599, %v705
          %v742 = vmax.f32 %v601, %v707
          %v743 = vmax.f32 %v605, %v711
          %v744 = vmax.f32 %v607, %v713
          %v745 = vmax.f32 %v609, %v715
          %v746 = vmax.f32 %v611, %v717
          %v747 = vmax.f32 %v615, %v721
          %v748 = vmax.f32 %v617, %v723
          %v749 = vmax.f32 %v619, %v725
          %v750 = vmax.f32 %v621, %v727
          %v751 = vmax.f32 %v625, %v731
          %v752 = vmax.f32 %v627, %v733
          %v753 = vmax.f32 %v629, %v735
          %v754 = vmax.f32 %v631, %v737
          %s755 = scalar_lea.vmem %s375, 64 [#allocation7]
          %v756 = vld [vmem:[%s755] sm:$0xf]
          %v757 = vld [vmem:[%s755 + $0x4] sm:$0xf]
          %v758 = vld [vmem:[%s755 + $0x8] sm:$0xf]
          %v759 = vld [vmem:[%s755 + $0xc] sm:$0xf]
          %v760 = vld [vmem:[%s755 + $0x10] sm:$0xf]
          %v761 = vld [vmem:[%s755 + $0x14] sm:$0xf]
          %v762 = vld [vmem:[%s755 + $0x18] sm:$0xf]
          %v763 = vld [vmem:[%s755 + $0x1c] sm:$0xf]
          %v772 = vunpack.c.l.b16 %v756
          %v773 = vunpack.c.l.b16 %v757
          %v774 = vunpack.c.l.b16 %v758
          %v775 = vunpack.c.l.b16 %v759
          %v776 = vunpack.c.l.b16 %v760
          %v777 = vunpack.c.l.b16 %v761
          %v778 = vunpack.c.l.b16 %v762
          %v779 = vunpack.c.l.b16 %v763
          %v780 = vpack.c.b16 %v773, %v772
          %v781 = vpack.c.b16 %v775, %v774
          %v782 = vpack.c.b16 %v777, %v776
          %v783 = vpack.c.b16 %v779, %v778
          %788 = vmatprep.subr.bf16.mxu0 %v543
          %789 = vmatpush1.bf16.msra.mxu0 %v542
          %790 = vmatprep.subr.bf16.mxu0 %v541
          %791 = vmatpush1.bf16.msra.mxu0 %v540
          %792 = vmatprep.subr.bf16.mxu0 %v539
          %793 = vmatpush1.bf16.msra.mxu0 %v538
          %794 = vmatprep.subr.bf16.mxu0 %v537
          %795 = vmatpush1.bf16.msra.mxu0 %v536
          %796 = vmatprep.subr.bf16.mxu0 %v535
          %797 = vmatpush1.bf16.msra.mxu0 %v534
          %798 = vmatprep.subr.bf16.mxu0 %v533
          %799 = vmatpush1.bf16.msra.mxu0 %v532
          %800 = vmatprep.subr.bf16.mxu0 %v531
          %801 = vmatpush1.bf16.msra.mxu0 %v530
          %802 = vmatprep.subr.bf16.mxu0 %v529
          %803 = vmatpush1.bf16.msra.mxu0 %v528
          %804 = vmatprep.subr.bf16.mxu0 0
          %805 = vmatpush2.bf16.msra.mxu0 0
          %806 = vmatprep.subr.bf16.mxu0 0
          %807 = vmatpush2.bf16.msra.mxu0 0
          %808 = vmatprep.subr.bf16.mxu0 0
          %809 = vmatpush2.bf16.msra.mxu0 0
          %810 = vmatprep.subr.bf16.mxu0 0
          %811 = vmatpush2.bf16.msra.mxu0 0
          %812 = vmatprep.subr.bf16.mxu0 0
          %813 = vmatpush2.bf16.msra.mxu0 0
          %814 = vmatprep.subr.bf16.mxu0 0
          %815 = vmatpush2.bf16.msra.mxu0 0
          %816 = vmatprep.subr.bf16.mxu0 0
          %817 = vmatpush2.bf16.msra.mxu0 0
          %818 = vmatprep.subr.bf16.mxu0 0
          %819 = vmatpush2.bf16.msra.mxu0 0
          %820 = vmatprep.mubr.bf16.mxu0 0
          %821 = vmatmul.mubr.bf16.gmra.mxu0 %v780
          %v822 = vpop.f32.mrf.mxu0
          %v823 = vadd.f32 0.0, %v822
          %v824 = vpop.f32.mrf.mxu0
          %v825 = vadd.f32 0.0, %v824
          %v826 = vpop.f32.mrf.mxu0
          %v827 = vadd.f32 0.0, %v826
          %v828 = vpop.f32.mrf.mxu0
          %v829 = vadd.f32 0.0, %v828
          %830 = vmatprep.mubr.bf16.mxu0 0
          %831 = vmatmul.mubr.bf16.gmra.mxu0 %v781
          %v832 = vpop.f32.mrf.mxu0
          %v833 = vadd.f32 0.0, %v832
          %v834 = vpop.f32.mrf.mxu0
          %v835 = vadd.f32 0.0, %v834
          %v836 = vpop.f32.mrf.mxu0
          %v837 = vadd.f32 0.0, %v836
          %v838 = vpop.f32.mrf.mxu0
          %v839 = vadd.f32 0.0, %v838
          %840 = vmatprep.mubr.bf16.mxu0 0
          %841 = vmatmul.mubr.bf16.gmra.mxu0 %v782
          %v842 = vpop.f32.mrf.mxu0
          %v843 = vadd.f32 0.0, %v842
          %v844 = vpop.f32.mrf.mxu0
          %v845 = vadd.f32 0.0, %v844
          %v846 = vpop.f32.mrf.mxu0
          %v847 = vadd.f32 0.0, %v846
          %v848 = vpop.f32.mrf.mxu0
          %v849 = vadd.f32 0.0, %v848
          %850 = vmatprep.mubr.bf16.mxu0 0
          %851 = vmatmul.mubr.bf16.gmra.mxu0 %v783
          %v852 = vpop.f32.mrf.mxu0
          %v853 = vadd.f32 0.0, %v852
          %v854 = vpop.f32.mrf.mxu0
          %v855 = vadd.f32 0.0, %v854
          %v856 = vpop.f32.mrf.mxu0
          %v857 = vadd.f32 0.0, %v856
          %v858 = vpop.f32.mrf.mxu0
          %v859 = vadd.f32 0.0, %v858
          %860 = vdwg.mxu0
          %v861 = vmax.f32 %v739, %v823
          %v862 = vmax.f32 %v740, %v825
          %v863 = vmax.f32 %v741, %v827
          %v864 = vmax.f32 %v742, %v829
          %v865 = vmax.f32 %v743, %v833
          %v866 = vmax.f32 %v744, %v835
          %v867 = vmax.f32 %v745, %v837
          %v868 = vmax.f32 %v746, %v839
          %v869 = vmax.f32 %v747, %v843
          %v870 = vmax.f32 %v748, %v845
          %v871 = vmax.f32 %v749, %v847
          %v872 = vmax.f32 %v750, %v849
          %v873 = vmax.f32 %v751, %v853
          %v874 = vmax.f32 %v752, %v855
          %v875 = vmax.f32 %v753, %v857
          %v876 = vmax.f32 %v754, %v859
          %s877 = scalar_lea.vmem %s375, 96 [#allocation7]
          %v878 = vld [vmem:[%s877] sm:$0xf]
          %v879 = vld [vmem:[%s877 + $0x4] sm:$0xf]
          %v880 = vld [vmem:[%s877 + $0x8] sm:$0xf]
          %v881 = vld [vmem:[%s877 + $0xc] sm:$0xf]
          %v882 = vld [vmem:[%s877 + $0x10] sm:$0xf]
          %v883 = vld [vmem:[%s877 + $0x14] sm:$0xf]
          %v884 = vld [vmem:[%s877 + $0x18] sm:$0xf]
          %v885 = vld [vmem:[%s877 + $0x1c] sm:$0xf]
          %v894 = vunpack.c.l.b16 %v878
          %v895 = vunpack.c.l.b16 %v879
          %v896 = vunpack.c.l.b16 %v880
          %v897 = vunpack.c.l.b16 %v881
          %v898 = vunpack.c.l.b16 %v882
          %v899 = vunpack.c.l.b16 %v883
          %v900 = vunpack.c.l.b16 %v884
          %v901 = vunpack.c.l.b16 %v885
          %v902 = vpack.c.b16 %v895, %v894
          %v903 = vpack.c.b16 %v897, %v896
          %v904 = vpack.c.b16 %v899, %v898
          %v905 = vpack.c.b16 %v901, %v900
          %910 = vmatprep.subr.bf16.mxu0 %v543
          %911 = vmatpush1.bf16.msra.mxu0 %v542
          %912 = vmatprep.subr.bf16.mxu0 %v541
          %913 = vmatpush1.bf16.msra.mxu0 %v540
          %914 = vmatprep.subr.bf16.mxu0 %v539
          %915 = vmatpush1.bf16.msra.mxu0 %v538
          %916 = vmatprep.subr.bf16.mxu0 %v537
          %917 = vmatpush1.bf16.msra.mxu0 %v536
          %918 = vmatprep.subr.bf16.mxu0 %v535
          %919 = vmatpush1.bf16.msra.mxu0 %v534
          %920 = vmatprep.subr.bf16.mxu0 %v533
          %921 = vmatpush1.bf16.msra.mxu0 %v532
          %922 = vmatprep.subr.bf16.mxu0 %v531
          %923 = vmatpush1.bf16.msra.mxu0 %v530
          %924 = vmatprep.subr.bf16.mxu0 %v529
          %925 = vmatpush1.bf16.msra.mxu0 %v528
          %926 = vmatprep.subr.bf16.mxu0 0
          %927 = vmatpush2.bf16.msra.mxu0 0
          %928 = vmatprep.subr.bf16.mxu0 0
          %929 = vmatpush2.bf16.msra.mxu0 0
          %930 = vmatprep.subr.bf16.mxu0 0
          %931 = vmatpush2.bf16.msra.mxu0 0
          %932 = vmatprep.subr.bf16.mxu0 0
          %933 = vmatpush2.bf16.msra.mxu0 0
          %934 = vmatprep.subr.bf16.mxu0 0
          %935 = vmatpush2.bf16.msra.mxu0 0
          %936 = vmatprep.subr.bf16.mxu0 0
          %937 = vmatpush2.bf16.msra.mxu0 0
          %938 = vmatprep.subr.bf16.mxu0 0
          %939 = vmatpush2.bf16.msra.mxu0 0
          %940 = vmatprep.subr.bf16.mxu0 0
          %941 = vmatpush2.bf16.msra.mxu0 0
          %942 = vmatprep.mubr.bf16.mxu0 0
          %943 = vmatmul.mubr.bf16.gmra.mxu0 %v902
          %v944 = vpop.f32.mrf.mxu0
          %v945 = vadd.f32 0.0, %v944
          %v946 = vpop.f32.mrf.mxu0
          %v947 = vadd.f32 0.0, %v946
          %v948 = vpop.f32.mrf.mxu0
          %v949 = vadd.f32 0.0, %v948
          %v950 = vpop.f32.mrf.mxu0
          %v951 = vadd.f32 0.0, %v950
          %952 = vmatprep.mubr.bf16.mxu0 0
          %953 = vmatmul.mubr.bf16.gmra.mxu0 %v903
          %v954 = vpop.f32.mrf.mxu0
          %v955 = vadd.f32 0.0, %v954
          %v956 = vpop.f32.mrf.mxu0
          %v957 = vadd.f32 0.0, %v956
          %v958 = vpop.f32.mrf.mxu0
          %v959 = vadd.f32 0.0, %v958
          %v960 = vpop.f32.mrf.mxu0
          %v961 = vadd.f32 0.0, %v960
          %962 = vmatprep.mubr.bf16.mxu0 0
          %963 = vmatmul.mubr.bf16.gmra.mxu0 %v904
          %v964 = vpop.f32.mrf.mxu0
          %v965 = vadd.f32 0.0, %v964
          %v966 = vpop.f32.mrf.mxu0
          %v967 = vadd.f32 0.0, %v966
          %v968 = vpop.f32.mrf.mxu0
          %v969 = vadd.f32 0.0, %v968
          %v970 = vpop.f32.mrf.mxu0
          %v971 = vadd.f32 0.0, %v970
          %972 = vmatprep.mubr.bf16.mxu0 0
          %973 = vmatmul.mubr.bf16.gmra.mxu0 %v905
          %v974 = vpop.f32.mrf.mxu0
          %v975 = vadd.f32 0.0, %v974
          %v976 = vpop.f32.mrf.mxu0
          %v977 = vadd.f32 0.0, %v976
          %v978 = vpop.f32.mrf.mxu0
          %v979 = vadd.f32 0.0, %v978
          %v980 = vpop.f32.mrf.mxu0
          %v981 = vadd.f32 0.0, %v980
          %982 = vdwg.mxu0
          %v983 = vmax.f32 %v861, %v945
          %v984 = vmax.f32 %v862, %v947
          %v985 = vmax.f32 %v863, %v949
          %v986 = vmax.f32 %v864, %v951
          %v987 = vmax.f32 %v865, %v955
          %v988 = vmax.f32 %v866, %v957
          %v989 = vmax.f32 %v867, %v959
          %v990 = vmax.f32 %v868, %v961
          %v991 = vmax.f32 %v869, %v965
          %v992 = vmax.f32 %v870, %v967
          %v993 = vmax.f32 %v871, %v969
          %v994 = vmax.f32 %v872, %v971
          %v995 = vmax.f32 %v873, %v975
          %v996 = vmax.f32 %v874, %v977
          %v997 = vmax.f32 %v875, %v979
          %v998 = vmax.f32 %v876, %v981
          %v999 = vld [vmem:[%s5] sm:$0x3]
          %v1001 = vlaneseq
          %v1002 = vshrl.u32 %v1001, 7
          %v1003 = vsub.s32 0, %v1002
          %v1004 = vrot.slane %v999, %v1003
          %v1005 = vlaneseq
          %v1006 = vshrl.u32 %v1005, 7
          %v1007 = vsub.s32 1, %v1006
          %v1008 = vrot.slane %v999, %v1007
          %v1011 = vadd.f32 %v983, %v1004
          %v1012 = vadd.f32 %v984, %v1008
          %v1013 = vadd.f32 %v985, %v1004
          %v1014 = vadd.f32 %v986, %v1008
          %v1015 = vadd.f32 %v987, %v1004
          %v1016 = vadd.f32 %v988, %v1008
          %v1017 = vadd.f32 %v989, %v1004
          %v1018 = vadd.f32 %v990, %v1008
          %v1019 = vadd.f32 %v991, %v1004
          %v1020 = vadd.f32 %v992, %v1008
          %v1021 = vadd.f32 %v993, %v1004
          %v1022 = vadd.f32 %v994, %v1008
          %v1023 = vadd.f32 %v995, %v1004
          %v1024 = vadd.f32 %v996, %v1008
          %v1025 = vadd.f32 %v997, %v1004
          %v1026 = vadd.f32 %v998, %v1008
          %v1027 = vpack.c.bf16 %v1013, %v1011
          %v1028 = vpack.c.bf16 %v1017, %v1015
          %v1029 = vpack.c.bf16 %v1021, %v1019
          %v1030 = vpack.c.bf16 %v1025, %v1023
          %v1035 = vunpack.c.l.b16 %v1027
          %v1036 = vunpack.c.h.b16 %v1027
          %v1037 = vunpack.c.l.b16 %v1028
          %v1038 = vunpack.c.h.b16 %v1028
          %v1039 = vunpack.c.l.b16 %v1029
          %v1040 = vunpack.c.h.b16 %v1029
          %v1041 = vunpack.c.l.b16 %v1030
          %v1042 = vunpack.c.h.b16 %v1030
          %v1043 = vpack.c.b16 %v1035, %v1035
          %v1044 = vpack.c.b16 %v1036, %v1036
          %v1045 = vpack.c.b16 %v1037, %v1037
          %v1046 = vpack.c.b16 %v1038, %v1038
          %v1047 = vpack.c.b16 %v1039, %v1039
          %v1048 = vpack.c.b16 %v1040, %v1040
          %v1049 = vpack.c.b16 %v1041, %v1041
          %v1050 = vpack.c.b16 %v1042, %v1042
          %1059 = vst [vmem:[#allocation2] sm:$0xf] %v1043
          %1060 = vst [vmem:[#allocation2 + $0x4] sm:$0xf] %v1044
          %1061 = vst [vmem:[#allocation2 + $0x8] sm:$0xf] %v1045
          %1062 = vst [vmem:[#allocation2 + $0xc] sm:$0xf] %v1046
          %1063 = vst [vmem:[#allocation2 + $0x10] sm:$0xf] %v1047
          %1064 = vst [vmem:[#allocation2 + $0x14] sm:$0xf] %v1048
          %1065 = vst [vmem:[#allocation2 + $0x18] sm:$0xf] %v1049
          %1066 = vst [vmem:[#allocation2 + $0x1c] sm:$0xf] %v1050
          %v1067 = vpack.c.bf16 %v1014, %v1012
          %v1068 = vpack.c.bf16 %v1018, %v1016
          %v1069 = vpack.c.bf16 %v1022, %v1020
          %v1070 = vpack.c.bf16 %v1026, %v1024
          %v1075 = vunpack.c.l.b16 %v1067
          %v1076 = vunpack.c.h.b16 %v1067
          %v1077 = vunpack.c.l.b16 %v1068
          %v1078 = vunpack.c.h.b16 %v1068
          %v1079 = vunpack.c.l.b16 %v1069
          %v1080 = vunpack.c.h.b16 %v1069
          %v1081 = vunpack.c.l.b16 %v1070
          %v1082 = vunpack.c.h.b16 %v1070
          %v1083 = vpack.c.b16 %v1075, %v1075
          %v1084 = vpack.c.b16 %v1076, %v1076
          %v1085 = vpack.c.b16 %v1077, %v1077
          %v1086 = vpack.c.b16 %v1078, %v1078
          %v1087 = vpack.c.b16 %v1079, %v1079
          %v1088 = vpack.c.b16 %v1080, %v1080
          %v1089 = vpack.c.b16 %v1081, %v1081
          %v1090 = vpack.c.b16 %v1082, %v1082
          %1099 = vst [vmem:[#allocation3] sm:$0xf] %v1083
          %1100 = vst [vmem:[#allocation3 + $0x4] sm:$0xf] %v1084
          %1101 = vst [vmem:[#allocation3 + $0x8] sm:$0xf] %v1085
          %1102 = vst [vmem:[#allocation3 + $0xc] sm:$0xf] %v1086
          %1103 = vst [vmem:[#allocation3 + $0x10] sm:$0xf] %v1087
          %1104 = vst [vmem:[#allocation3 + $0x14] sm:$0xf] %v1088
          %1105 = vst [vmem:[#allocation3 + $0x18] sm:$0xf] %v1089
          %1106 = vst [vmem:[#allocation3 + $0x1c] sm:$0xf] %v1090
        $region76: #{tpu_custom_call.1} parent=51 // pred_fallthru
          _
        %v1107 = vld [vmem:[%s366] sm:$0xff]
        %v1108 = vld [vmem:[%s366 + $0x8] sm:$0xff]
        %v1109 = vld [vmem:[%s366 + $0x10] sm:$0xff]
        %v1110 = vld [vmem:[%s366 + $0x18] sm:$0xff]
        %v1111 = vld [vmem:[%s366 + $0x20] sm:$0xff]
        %v1112 = vld [vmem:[%s366 + $0x28] sm:$0xff]
        %v1113 = vld [vmem:[%s366 + $0x30] sm:$0xff]
        %v1114 = vld [vmem:[%s366 + $0x38] sm:$0xff]
        %v1115 = vld [vmem:[%s366 + $0x40] sm:$0xff]
        %v1116 = vld [vmem:[%s366 + $0x48] sm:$0xff]
        %v1117 = vld [vmem:[%s366 + $0x50] sm:$0xff]
        %v1118 = vld [vmem:[%s366 + $0x58] sm:$0xff]
        %v1119 = vld [vmem:[%s366 + $0x60] sm:$0xff]
        %v1120 = vld [vmem:[%s366 + $0x68] sm:$0xff]
        %v1121 = vld [vmem:[%s366 + $0x70] sm:$0xff]
        %v1122 = vld [vmem:[%s366 + $0x78] sm:$0xff]
        %v1123 = vpack.c.bf16 %v1108, %v1107
        %v1124 = vpack.c.bf16 %v1110, %v1109
        %v1125 = vpack.c.bf16 %v1112, %v1111
        %v1126 = vpack.c.bf16 %v1114, %v1113
        %v1127 = vpack.c.bf16 %v1116, %v1115
        %v1128 = vpack.c.bf16 %v1118, %v1117
        %v1129 = vpack.c.bf16 %v1120, %v1119
        %v1130 = vpack.c.bf16 %v1122, %v1121
        %v1131 = vld [vmem:[#allocation9] sm:$0xf]
        %v1132 = vld [vmem:[#allocation9 + $0x4] sm:$0xf]
        %v1133 = vld [vmem:[#allocation9 + $0x8] sm:$0xf]
        %v1134 = vld [vmem:[#allocation9 + $0xc] sm:$0xf]
        %v1135 = vld [vmem:[#allocation9 + $0x10] sm:$0xf]
        %v1136 = vld [vmem:[#allocation9 + $0x14] sm:$0xf]
        %v1137 = vld [vmem:[#allocation9 + $0x18] sm:$0xf]
        %v1138 = vld [vmem:[#allocation9 + $0x1c] sm:$0xf]
        %v1139 = vld [vmem:[#allocation9 + $0x20] sm:$0xf]
        %v1140 = vld [vmem:[#allocation9 + $0x24] sm:$0xf]
        %v1141 = vld [vmem:[#allocation9 + $0x28] sm:$0xf]
        %v1142 = vld [vmem:[#allocation9 + $0x2c] sm:$0xf]
        %v1143 = vld [vmem:[#allocation9 + $0x30] sm:$0xf]
        %v1144 = vld [vmem:[#allocation9 + $0x34] sm:$0xf]
        %v1145 = vld [vmem:[#allocation9 + $0x38] sm:$0xf]
        %v1146 = vld [vmem:[#allocation9 + $0x3c] sm:$0xf]
        %v1147 = vld [vmem:[%s3] sm:$0x1]
        %v1149 = vlaneseq
        %v1150 = vshrl.u32 %v1149, 7
        %v1151 = vsub.s32 0, %v1150
        %v1152 = vrot.slane %v1147, %v1151
        %v1170 = vunpack.c.l.b16 %v1131
        %v1171 = vunpack.c.l.b16 %v1132
        %v1172 = vunpack.c.l.b16 %v1133
        %v1173 = vunpack.c.l.b16 %v1134
        %v1174 = vunpack.c.l.b16 %v1135
        %v1175 = vunpack.c.l.b16 %v1136
        %v1176 = vunpack.c.l.b16 %v1137
        %v1177 = vunpack.c.l.b16 %v1138
        %v1178 = vunpack.c.l.b16 %v1139
        %v1179 = vunpack.c.l.b16 %v1140
        %v1180 = vunpack.c.l.b16 %v1141
        %v1181 = vunpack.c.l.b16 %v1142
        %v1182 = vunpack.c.l.b16 %v1143
        %v1183 = vunpack.c.l.b16 %v1144
        %v1184 = vunpack.c.l.b16 %v1145
        %v1185 = vunpack.c.l.b16 %v1146
        %v1186 = vpack.c.b16 %v1171, %v1170
        %v1187 = vpack.c.b16 %v1173, %v1172
        %v1188 = vpack.c.b16 %v1175, %v1174
        %v1189 = vpack.c.b16 %v1177, %v1176
        %v1190 = vpack.c.b16 %v1179, %v1178
        %v1191 = vpack.c.b16 %v1181, %v1180
        %v1192 = vpack.c.b16 %v1183, %v1182
        %v1193 = vpack.c.b16 %v1185, %v1184
        %1202 = vmatprep.subr.bf16.mxu0 0
        %1203 = vmatpush1.bf16.msra.mxu0 %v1193
        %1204 = vmatprep.subr.bf16.mxu0 0
        %1205 = vmatpush1.bf16.msra.mxu0 %v1192
        %1206 = vmatprep.subr.bf16.mxu0 0
        %1207 = vmatpush1.bf16.msra.mxu0 %v1191
        %1208 = vmatprep.subr.bf16.mxu0 0
        %1209 = vmatpush1.bf16.msra.mxu0 %v1190
        %1210 = vmatprep.subr.bf16.mxu0 0
        %1211 = vmatpush1.bf16.msra.mxu0 %v1189
        %1212 = vmatprep.subr.bf16.mxu0 0
        %1213 = vmatpush1.bf16.msra.mxu0 %v1188
        %1214 = vmatprep.subr.bf16.mxu0 0
        %1215 = vmatpush1.bf16.msra.mxu0 %v1187
        %1216 = vmatprep.subr.bf16.mxu0 0
        %1217 = vmatpush1.bf16.msra.mxu0 %v1186
        %1218 = vmatprep.subr.bf16.mxu0 0
        %1219 = vmatpush2.bf16.msra.mxu0 0
        %1220 = vmatprep.subr.bf16.mxu0 0
        %1221 = vmatpush2.bf16.msra.mxu0 0
        %1222 = vmatprep.subr.bf16.mxu0 0
        %1223 = vmatpush2.bf16.msra.mxu0 0
        %1224 = vmatprep.subr.bf16.mxu0 0
        %1225 = vmatpush2.bf16.msra.mxu0 0
        %1226 = vmatprep.subr.bf16.mxu0 0
        %1227 = vmatpush2.bf16.msra.mxu0 0
        %1228 = vmatprep.subr.bf16.mxu0 0
        %1229 = vmatpush2.bf16.msra.mxu0 0
        %1230 = vmatprep.subr.bf16.mxu0 0
        %1231 = vmatpush2.bf16.msra.mxu0 0
        %1232 = vmatprep.subr.bf16.mxu0 0
        %1233 = vmatpush2.bf16.msra.mxu0 0
        %1234 = vmatprep.mubr.bf16.mxu0 0
        %1235 = vmatmul.mubr.bf16.gmra.mxu0 %v1123
        %v1236 = vpop.f32.mrf.mxu0
        %v1237 = vadd.f32 %v1152, %v1236
        %v1238 = vpop.f32.mrf.mxu0
        %v1239 = vpop.f32.mrf.mxu0
        %v1240 = vadd.f32 %v1152, %v1239
        %v1241 = vpop.f32.mrf.mxu0
        %1242 = vmatprep.mubr.bf16.mxu0 0
        %1243 = vmatmul.mubr.bf16.gmra.mxu0 %v1124
        %v1244 = vpop.f32.mrf.mxu0
        %v1245 = vadd.f32 %v1152, %v1244
        %v1246 = vpop.f32.mrf.mxu0
        %v1247 = vpop.f32.mrf.mxu0
        %v1248 = vadd.f32 %v1152, %v1247
        %v1249 = vpop.f32.mrf.mxu0
        %1250 = vmatprep.mubr.bf16.mxu0 0
        %1251 = vmatmul.mubr.bf16.gmra.mxu0 %v1125
        %v1252 = vpop.f32.mrf.mxu0
        %v1253 = vadd.f32 %v1152, %v1252
        %v1254 = vpop.f32.mrf.mxu0
        %v1255 = vpop.f32.mrf.mxu0
        %v1256 = vadd.f32 %v1152, %v1255
        %v1257 = vpop.f32.mrf.mxu0
        %1258 = vmatprep.mubr.bf16.mxu0 0
        %1259 = vmatmul.mubr.bf16.gmra.mxu0 %v1126
        %v1260 = vpop.f32.mrf.mxu0
        %v1261 = vadd.f32 %v1152, %v1260
        %v1262 = vpop.f32.mrf.mxu0
        %v1263 = vpop.f32.mrf.mxu0
        %v1264 = vadd.f32 %v1152, %v1263
        %v1265 = vpop.f32.mrf.mxu0
        %1266 = vmatprep.mubr.bf16.mxu0 0
        %1267 = vmatmul.mubr.bf16.gmra.mxu0 %v1127
        %v1268 = vpop.f32.mrf.mxu0
        %v1269 = vadd.f32 %v1152, %v1268
        %v1270 = vpop.f32.mrf.mxu0
        %v1271 = vpop.f32.mrf.mxu0
        %v1272 = vadd.f32 %v1152, %v1271
        %v1273 = vpop.f32.mrf.mxu0
        %1274 = vmatprep.mubr.bf16.mxu0 0
        %1275 = vmatmul.mubr.bf16.gmra.mxu0 %v1128
        %v1276 = vpop.f32.mrf.mxu0
        %v1277 = vadd.f32 %v1152, %v1276
        %v1278 = vpop.f32.mrf.mxu0
        %v1279 = vpop.f32.mrf.mxu0
        %v1280 = vadd.f32 %v1152, %v1279
        %v1281 = vpop.f32.mrf.mxu0
        %1282 = vmatprep.mubr.bf16.mxu0 0
        %1283 = vmatmul.mubr.bf16.gmra.mxu0 %v1129
        %v1284 = vpop.f32.mrf.mxu0
        %v1285 = vadd.f32 %v1152, %v1284
        %v1286 = vpop.f32.mrf.mxu0
        %v1287 = vpop.f32.mrf.mxu0
        %v1288 = vadd.f32 %v1152, %v1287
        %v1289 = vpop.f32.mrf.mxu0
        %1290 = vmatprep.mubr.bf16.mxu0 0
        %1291 = vmatmul.mubr.bf16.gmra.mxu0 %v1130
        %v1292 = vpop.f32.mrf.mxu0
        %v1293 = vadd.f32 %v1152, %v1292
        %v1294 = vpop.f32.mrf.mxu0
        %v1295 = vpop.f32.mrf.mxu0
        %v1296 = vadd.f32 %v1152, %v1295
        %v1297 = vpop.f32.mrf.mxu0
        %1298 = vdwg.mxu0
        %v1299 = vpack.c.bf16 %v1240, %v1237
        %v1300 = vpack.c.bf16 %v1248, %v1245
        %v1301 = vpack.c.bf16 %v1256, %v1253
        %v1302 = vpack.c.bf16 %v1264, %v1261
        %v1303 = vpack.c.bf16 %v1272, %v1269
        %v1304 = vpack.c.bf16 %v1280, %v1277
        %v1305 = vpack.c.bf16 %v1288, %v1285
        %v1306 = vpack.c.bf16 %v1296, %v1293
        %v1307 = vld [vmem:[#allocation2] sm:$0xf]
        %v1308 = vld [vmem:[#allocation2 + $0x4] sm:$0xf]
        %v1309 = vld [vmem:[#allocation2 + $0x8] sm:$0xf]
        %v1310 = vld [vmem:[#allocation2 + $0xc] sm:$0xf]
        %v1311 = vld [vmem:[#allocation2 + $0x10] sm:$0xf]
        %v1312 = vld [vmem:[#allocation2 + $0x14] sm:$0xf]
        %v1313 = vld [vmem:[#allocation2 + $0x18] sm:$0xf]
        %v1314 = vld [vmem:[#allocation2 + $0x1c] sm:$0xf]
        %v1323 = vunpack.c.l.b16 %v1307
        %v1324 = vunpack.c.l.b16 %v1308
        %v1325 = vunpack.c.l.b16 %v1309
        %v1326 = vunpack.c.l.b16 %v1310
        %v1327 = vunpack.c.l.b16 %v1311
        %v1328 = vunpack.c.l.b16 %v1312
        %v1329 = vunpack.c.l.b16 %v1313
        %v1330 = vunpack.c.l.b16 %v1314
        %v1331 = vpack.c.b16 %v1324, %v1323
        %v1332 = vpack.c.b16 %v1326, %v1325
        %v1333 = vpack.c.b16 %v1328, %v1327
        %v1334 = vpack.c.b16 %v1330, %v1329
        %1339 = vmatprep.subr.bf16.mxu0 0
        %1340 = vmatpush1.bf16.xpose.msra.mxu0 0
        %1341 = vmatprep.subr.bf16.mxu0 0
        %1342 = vmatpush1.bf16.xpose.msra.mxu0 0
        %1343 = vmatprep.subr.bf16.mxu0 0
        %1344 = vmatpush1.bf16.xpose.msra.mxu0 0
        %1345 = vmatprep.subr.bf16.mxu0 0
        %1346 = vmatpush1.bf16.xpose.msra.mxu0 0
        %1347 = vmatprep.subr.bf16.mxu0 0
        %1348 = vmatpush1.bf16.xpose.msra.mxu0 %v1334
        %1349 = vmatprep.subr.bf16.mxu0 0
        %1350 = vmatpush1.bf16.xpose.msra.mxu0 %v1333
        %1351 = vmatprep.subr.bf16.mxu0 0
        %1352 = vmatpush1.bf16.xpose.msra.mxu0 %v1332
        %1353 = vmatprep.subr.bf16.mxu0 0
        %1354 = vmatpush1.bf16.xpose.msra.mxu0 %v1331
        %1355 = vmatprep.subr.bf16.mxu0 0
        %1356 = vmatpush2.bf16.xpose.msra.mxu0 0
        %1357 = vmatprep.subr.bf16.mxu0 0
        %1358 = vmatpush2.bf16.xpose.msra.mxu0 0
        %1359 = vmatprep.subr.bf16.mxu0 0
        %1360 = vmatpush2.bf16.xpose.msra.mxu0 0
        %1361 = vmatprep.subr.bf16.mxu0 0
        %1362 = vmatpush2.bf16.xpose.msra.mxu0 0
        %1363 = vmatprep.subr.bf16.mxu0 0
        %1364 = vmatpush2.bf16.xpose.msra.mxu0 0
        %1365 = vmatprep.subr.bf16.mxu0 0
        %1366 = vmatpush2.bf16.xpose.msra.mxu0 0
        %1367 = vmatprep.subr.bf16.mxu0 0
        %1368 = vmatpush2.bf16.xpose.msra.mxu0 0
        %1369 = vmatprep.subr.bf16.mxu0 0
        %1370 = vmatpush2.bf16.xpose.msra.mxu0 0
        %1371 = vmatprep.mubr.bf16.mxu0 0
        %1372 = vmatmul.mubr.bf16.gmra.mxu0 %v1299
        %v1373 = vpop.f32.mrf.mxu0
        %v1374 = vadd.f32 0.0, %v1373
        %v1375 = vpop.f32.mrf.mxu0
        %v1376 = vpop.f32.mrf.mxu0
        %v1377 = vadd.f32 0.0, %v1376
        %v1378 = vpop.f32.mrf.mxu0
        %1379 = vmatprep.mubr.bf16.mxu0 0
        %1380 = vmatmul.mubr.bf16.gmra.mxu0 %v1300
        %v1381 = vpop.f32.mrf.mxu0
        %v1382 = vadd.f32 0.0, %v1381
        %v1383 = vpop.f32.mrf.mxu0
        %v1384 = vpop.f32.mrf.mxu0
        %v1385 = vadd.f32 0.0, %v1384
        %v1386 = vpop.f32.mrf.mxu0
        %1387 = vmatprep.mubr.bf16.mxu0 0
        %1388 = vmatmul.mubr.bf16.gmra.mxu0 %v1301
        %v1389 = vpop.f32.mrf.mxu0
        %v1390 = vadd.f32 0.0, %v1389
        %v1391 = vpop.f32.mrf.mxu0
        %v1392 = vpop.f32.mrf.mxu0
        %v1393 = vadd.f32 0.0, %v1392
        %v1394 = vpop.f32.mrf.mxu0
        %1395 = vmatprep.mubr.bf16.mxu0 0
        %1396 = vmatmul.mubr.bf16.gmra.mxu0 %v1302
        %v1397 = vpop.f32.mrf.mxu0
        %v1398 = vadd.f32 0.0, %v1397
        %v1399 = vpop.f32.mrf.mxu0
        %v1400 = vpop.f32.mrf.mxu0
        %v1401 = vadd.f32 0.0, %v1400
        %v1402 = vpop.f32.mrf.mxu0
        %1403 = vmatprep.mubr.bf16.mxu0 0
        %1404 = vmatmul.mubr.bf16.gmra.mxu0 %v1303
        %v1405 = vpop.f32.mrf.mxu0
        %v1406 = vadd.f32 0.0, %v1405
        %v1407 = vpop.f32.mrf.mxu0
        %v1408 = vpop.f32.mrf.mxu0
        %v1409 = vadd.f32 0.0, %v1408
        %v1410 = vpop.f32.mrf.mxu0
        %1411 = vmatprep.mubr.bf16.mxu0 0
        %1412 = vmatmul.mubr.bf16.gmra.mxu0 %v1304
        %v1413 = vpop.f32.mrf.mxu0
        %v1414 = vadd.f32 0.0, %v1413
        %v1415 = vpop.f32.mrf.mxu0
        %v1416 = vpop.f32.mrf.mxu0
        %v1417 = vadd.f32 0.0, %v1416
        %v1418 = vpop.f32.mrf.mxu0
        %1419 = vmatprep.mubr.bf16.mxu0 0
        %1420 = vmatmul.mubr.bf16.gmra.mxu0 %v1305
        %v1421 = vpop.f32.mrf.mxu0
        %v1422 = vadd.f32 0.0, %v1421
        %v1423 = vpop.f32.mrf.mxu0
        %v1424 = vpop.f32.mrf.mxu0
        %v1425 = vadd.f32 0.0, %v1424
        %v1426 = vpop.f32.mrf.mxu0
        %1427 = vmatprep.mubr.bf16.mxu0 0
        %1428 = vmatmul.mubr.bf16.gmra.mxu0 %v1306
        %v1429 = vpop.f32.mrf.mxu0
        %v1430 = vadd.f32 0.0, %v1429
        %v1431 = vpop.f32.mrf.mxu0
        %v1432 = vpop.f32.mrf.mxu0
        %v1433 = vadd.f32 0.0, %v1432
        %v1434 = vpop.f32.mrf.mxu0
        %1435 = vdwg.mxu0
        %vm1436 = vcmask 523264
        %v1437 = vsel %vm1436, %v1374, -inf
        %1438 = vmax.xlane.f32.xlu0 %v1437
        %v1439 = vpop.xlane.xlu0 %1438
        %v1440 = vsel %vm1436, %v1377, -inf
        %1441 = vmax.xlane.f32.xlu0 %v1440
        %v1442 = vpop.xlane.xlu0 %1441
        %v1443 = vsel %vm1436, %v1382, -inf
        %1444 = vmax.xlane.f32.xlu0 %v1443
        %v1445 = vpop.xlane.xlu0 %1444
        %v1446 = vsel %vm1436, %v1385, -inf
        %1447 = vmax.xlane.f32.xlu0 %v1446
        %v1448 = vpop.xlane.xlu0 %1447
        %v1449 = vsel %vm1436, %v1390, -inf
        %1450 = vmax.xlane.f32.xlu0 %v1449
        %v1451 = vpop.xlane.xlu0 %1450
        %v1452 = vsel %vm1436, %v1393, -inf
        %1453 = vmax.xlane.f32.xlu0 %v1452
        %v1454 = vpop.xlane.xlu0 %1453
        %v1455 = vsel %vm1436, %v1398, -inf
        %1456 = vmax.xlane.f32.xlu0 %v1455
        %v1457 = vpop.xlane.xlu0 %1456
        %v1458 = vsel %vm1436, %v1401, -inf
        %1459 = vmax.xlane.f32.xlu0 %v1458
        %v1460 = vpop.xlane.xlu0 %1459
        %v1461 = vsel %vm1436, %v1406, -inf
        %1462 = vmax.xlane.f32.xlu0 %v1461
        %v1463 = vpop.xlane.xlu0 %1462
        %v1464 = vsel %vm1436, %v1409, -inf
        %1465 = vmax.xlane.f32.xlu0 %v1464
        %v1466 = vpop.xlane.xlu0 %1465
        %v1467 = vsel %vm1436, %v1414, -inf
        %1468 = vmax.xlane.f32.xlu0 %v1467
        %v1469 = vpop.xlane.xlu0 %1468
        %v1470 = vsel %vm1436, %v1417, -inf
        %1471 = vmax.xlane.f32.xlu0 %v1470
        %v1472 = vpop.xlane.xlu0 %1471
        %v1473 = vsel %vm1436, %v1422, -inf
        %1474 = vmax.xlane.f32.xlu0 %v1473
        %v1475 = vpop.xlane.xlu0 %1474
        %v1476 = vsel %vm1436, %v1425, -inf
        %1477 = vmax.xlane.f32.xlu0 %v1476
        %v1478 = vpop.xlane.xlu0 %1477
        %v1479 = vsel %vm1436, %v1430, -inf
        %1480 = vmax.xlane.f32.xlu0 %v1479
        %v1481 = vpop.xlane.xlu0 %1480
        %v1482 = vsel %vm1436, %v1433, -inf
        %1483 = vmax.xlane.f32.xlu0 %v1482
        %v1484 = vpop.xlane.xlu0 %1483
        %v1485 = vsub.f32 %v1374, %v1439
        %v1486 = vsub.f32 %v1377, %v1442
        %v1487 = vsub.f32 %v1382, %v1445
        %v1488 = vsub.f32 %v1385, %v1448
        %v1489 = vsub.f32 %v1390, %v1451
        %v1490 = vsub.f32 %v1393, %v1454
        %v1491 = vsub.f32 %v1398, %v1457
        %v1492 = vsub.f32 %v1401, %v1460
        %v1493 = vsub.f32 %v1406, %v1463
        %v1494 = vsub.f32 %v1409, %v1466
        %v1495 = vsub.f32 %v1414, %v1469
        %v1496 = vsub.f32 %v1417, %v1472
        %v1497 = vsub.f32 %v1422, %v1475
        %v1498 = vsub.f32 %v1425, %v1478
        %v1499 = vsub.f32 %v1430, %v1481
        %v1500 = vsub.f32 %v1433, %v1484
        %v1501 = vmul.f32 %v1485, 1.442695
        %v1502 = vpow.pop %v1501
        %v1503 = vmul.f32 %v1486, 1.442695
        %v1504 = vpow.pop %v1503
        %v1505 = vmul.f32 %v1487, 1.442695
        %v1506 = vpow.pop %v1505
        %v1507 = vmul.f32 %v1488, 1.442695
        %v1508 = vpow.pop %v1507
        %v1509 = vmul.f32 %v1489, 1.442695
        %v1510 = vpow.pop %v1509
        %v1511 = vmul.f32 %v1490, 1.442695
        %v1512 = vpow.pop %v1511
        %v1513 = vmul.f32 %v1491, 1.442695
        %v1514 = vpow.pop %v1513
        %v1515 = vmul.f32 %v1492, 1.442695
        %v1516 = vpow.pop %v1515
        %v1517 = vmul.f32 %v1493, 1.442695
        %v1518 = vpow.pop %v1517
        %v1519 = vmul.f32 %v1494, 1.442695
        %v1520 = vpow.pop %v1519
        %v1521 = vmul.f32 %v1495, 1.442695
        %v1522 = vpow.pop %v1521
        %v1523 = vmul.f32 %v1496, 1.442695
        %v1524 = vpow.pop %v1523
        %v1525 = vmul.f32 %v1497, 1.442695
        %v1526 = vpow.pop %v1525
        %v1527 = vmul.f32 %v1498, 1.442695
        %v1528 = vpow.pop %v1527
        %v1529 = vmul.f32 %v1499, 1.442695
        %v1530 = vpow.pop %v1529
        %v1531 = vmul.f32 %v1500, 1.442695
        %v1532 = vpow.pop %v1531
        %v1533 = vsel %vm1436, %v1502, 0.0
        %1534 = vadd.xlane.f32.xlu0 %v1533
        %v1535 = vpop.xlane.xlu0 %1534
        %v1536 = vsel %vm1436, %v1504, 0.0
        %1537 = vadd.xlane.f32.xlu0 %v1536
        %v1538 = vpop.xlane.xlu0 %1537
        %v1539 = vsel %vm1436, %v1506, 0.0
        %1540 = vadd.xlane.f32.xlu0 %v1539
        %v1541 = vpop.xlane.xlu0 %1540
        %v1542 = vsel %vm1436, %v1508, 0.0
        %1543 = vadd.xlane.f32.xlu0 %v1542
        %v1544 = vpop.xlane.xlu0 %1543
        %v1545 = vsel %vm1436, %v1510, 0.0
        %1546 = vadd.xlane.f32.xlu0 %v1545
        %v1547 = vpop.xlane.xlu0 %1546
        %v1548 = vsel %vm1436, %v1512, 0.0
        %1549 = vadd.xlane.f32.xlu0 %v1548
        %v1550 = vpop.xlane.xlu0 %1549
        %v1551 = vsel %vm1436, %v1514, 0.0
        %1552 = vadd.xlane.f32.xlu0 %v1551
        %v1553 = vpop.xlane.xlu0 %1552
        %v1554 = vsel %vm1436, %v1516, 0.0
        %1555 = vadd.xlane.f32.xlu0 %v1554
        %v1556 = vpop.xlane.xlu0 %1555
        %v1557 = vsel %vm1436, %v1518, 0.0
        %1558 = vadd.xlane.f32.xlu0 %v1557
        %v1559 = vpop.xlane.xlu0 %1558
        %v1560 = vsel %vm1436, %v1520, 0.0
        %1561 = vadd.xlane.f32.xlu0 %v1560
        %v1562 = vpop.xlane.xlu0 %1561
        %v1563 = vsel %vm1436, %v1522, 0.0
        %1564 = vadd.xlane.f32.xlu0 %v1563
        %v1565 = vpop.xlane.xlu0 %1564
        %v1566 = vsel %vm1436, %v1524, 0.0
        %1567 = vadd.xlane.f32.xlu0 %v1566
        %v1568 = vpop.xlane.xlu0 %1567
        %v1569 = vsel %vm1436, %v1526, 0.0
        %1570 = vadd.xlane.f32.xlu0 %v1569
        %v1571 = vpop.xlane.xlu0 %1570
        %v1572 = vsel %vm1436, %v1528, 0.0
        %1573 = vadd.xlane.f32.xlu0 %v1572
        %v1574 = vpop.xlane.xlu0 %1573
        %v1575 = vsel %vm1436, %v1530, 0.0
        %1576 = vadd.xlane.f32.xlu0 %v1575
        %v1577 = vpop.xlane.xlu0 %1576
        %v1578 = vsel %vm1436, %v1532, 0.0
        %1579 = vadd.xlane.f32.xlu0 %v1578
        %v1580 = vpop.xlane.xlu0 %1579
        %v1581 = vpack.c.bf16 %v1504, %v1502
        %v1582 = vpack.c.bf16 %v1508, %v1506
        %v1583 = vpack.c.bf16 %v1512, %v1510
        %v1584 = vpack.c.bf16 %v1516, %v1514
        %v1585 = vpack.c.bf16 %v1520, %v1518
        %v1586 = vpack.c.bf16 %v1524, %v1522
        %v1587 = vpack.c.bf16 %v1528, %v1526
        %v1588 = vpack.c.bf16 %v1532, %v1530
        %v1589 = vld [vmem:[#allocation3] sm:$0xf]
        %v1590 = vld [vmem:[#allocation3 + $0x4] sm:$0xf]
        %v1591 = vld [vmem:[#allocation3 + $0x8] sm:$0xf]
        %v1592 = vld [vmem:[#allocation3 + $0xc] sm:$0xf]
        %v1593 = vld [vmem:[#allocation3 + $0x10] sm:$0xf]
        %v1594 = vld [vmem:[#allocation3 + $0x14] sm:$0xf]
        %v1595 = vld [vmem:[#allocation3 + $0x18] sm:$0xf]
        %v1596 = vld [vmem:[#allocation3 + $0x1c] sm:$0xf]
        %v1605 = vunpack.c.l.b16 %v1589
        %v1606 = vunpack.c.l.b16 %v1590
        %v1607 = vunpack.c.l.b16 %v1591
        %v1608 = vunpack.c.l.b16 %v1592
        %v1609 = vunpack.c.l.b16 %v1593
        %v1610 = vunpack.c.l.b16 %v1594
        %v1611 = vunpack.c.l.b16 %v1595
        %v1612 = vunpack.c.l.b16 %v1596
        %v1613 = vpack.c.b16 %v1606, %v1605
        %v1614 = vpack.c.b16 %v1608, %v1607
        %v1615 = vpack.c.b16 %v1610, %v1609
        %v1616 = vpack.c.b16 %v1612, %v1611
        %v1622 = vsel %vm1436, %v1581, 0
        %v1625 = vsel %vm1436, %v1582, 0
        %v1628 = vsel %vm1436, %v1583, 0
        %v1631 = vsel %vm1436, %v1584, 0
        %v1634 = vsel %vm1436, %v1585, 0
        %v1637 = vsel %vm1436, %v1586, 0
        %v1640 = vsel %vm1436, %v1587, 0
        %v1643 = vsel %vm1436, %v1588, 0
        %1645 = vmatprep.subr.bf16.mxu0 0
        %1646 = vmatpush1.bf16.msra.mxu0 0
        %1647 = vmatprep.subr.bf16.mxu0 0
        %1648 = vmatpush1.bf16.msra.mxu0 0
        %1649 = vmatprep.subr.bf16.mxu0 0
        %1650 = vmatpush1.bf16.msra.mxu0 0
        %1651 = vmatprep.subr.bf16.mxu0 0
        %1652 = vmatpush1.bf16.msra.mxu0 0
        %1653 = vmatprep.subr.bf16.mxu0 0
        %1654 = vmatpush1.bf16.msra.mxu0 %v1616
        %1655 = vmatprep.subr.bf16.mxu0 0
        %1656 = vmatpush1.bf16.msra.mxu0 %v1615
        %1657 = vmatprep.subr.bf16.mxu0 0
        %1658 = vmatpush1.bf16.msra.mxu0 %v1614
        %1659 = vmatprep.subr.bf16.mxu0 0
        %1660 = vmatpush1.bf16.msra.mxu0 %v1613
        %1661 = vmatprep.subr.bf16.mxu0 0
        %1662 = vmatpush2.bf16.msra.mxu0 0
        %1663 = vmatprep.subr.bf16.mxu0 0
        %1664 = vmatpush2.bf16.msra.mxu0 0
        %1665 = vmatprep.subr.bf16.mxu0 0
        %1666 = vmatpush2.bf16.msra.mxu0 0
        %1667 = vmatprep.subr.bf16.mxu0 0
        %1668 = vmatpush2.bf16.msra.mxu0 0
        %1669 = vmatprep.subr.bf16.mxu0 0
        %1670 = vmatpush2.bf16.msra.mxu0 0
        %1671 = vmatprep.subr.bf16.mxu0 0
        %1672 = vmatpush2.bf16.msra.mxu0 0
        %1673 = vmatprep.subr.bf16.mxu0 0
        %1674 = vmatpush2.bf16.msra.mxu0 0
        %1675 = vmatprep.subr.bf16.mxu0 0
        %1676 = vmatpush2.bf16.msra.mxu0 0
        %1677 = vmatprep.mubr.bf16.mxu0 0
        %1678 = vmatmul.mubr.bf16.gmra.mxu0 %v1622
        %v1679 = vpop.f32.mrf.mxu0
        %v1680 = vadd.f32 0.0, %v1679
        %v1681 = vpop.f32.mrf.mxu0
        %v1682 = vpop.f32.mrf.mxu0
        %v1683 = vadd.f32 0.0, %v1682
        %v1684 = vpop.f32.mrf.mxu0
        %1685 = vmatprep.mubr.bf16.mxu0 0
        %1686 = vmatmul.mubr.bf16.gmra.mxu0 %v1625
        %v1687 = vpop.f32.mrf.mxu0
        %v1688 = vadd.f32 0.0, %v1687
        %v1689 = vpop.f32.mrf.mxu0
        %v1690 = vpop.f32.mrf.mxu0
        %v1691 = vadd.f32 0.0, %v1690
        %v1692 = vpop.f32.mrf.mxu0
        %1693 = vmatprep.mubr.bf16.mxu0 0
        %1694 = vmatmul.mubr.bf16.gmra.mxu0 %v1628
        %v1695 = vpop.f32.mrf.mxu0
        %v1696 = vadd.f32 0.0, %v1695
        %v1697 = vpop.f32.mrf.mxu0
        %v1698 = vpop.f32.mrf.mxu0
        %v1699 = vadd.f32 0.0, %v1698
        %v1700 = vpop.f32.mrf.mxu0
        %1701 = vmatprep.mubr.bf16.mxu0 0
        %1702 = vmatmul.mubr.bf16.gmra.mxu0 %v1631
        %v1703 = vpop.f32.mrf.mxu0
        %v1704 = vadd.f32 0.0, %v1703
        %v1705 = vpop.f32.mrf.mxu0
        %v1706 = vpop.f32.mrf.mxu0
        %v1707 = vadd.f32 0.0, %v1706
        %v1708 = vpop.f32.mrf.mxu0
        %1709 = vmatprep.mubr.bf16.mxu0 0
        %1710 = vmatmul.mubr.bf16.gmra.mxu0 %v1634
        %v1711 = vpop.f32.mrf.mxu0
        %v1712 = vadd.f32 0.0, %v1711
        %v1713 = vpop.f32.mrf.mxu0
        %v1714 = vpop.f32.mrf.mxu0
        %v1715 = vadd.f32 0.0, %v1714
        %v1716 = vpop.f32.mrf.mxu0
        %1717 = vmatprep.mubr.bf16.mxu0 0
        %1718 = vmatmul.mubr.bf16.gmra.mxu0 %v1637
        %v1719 = vpop.f32.mrf.mxu0
        %v1720 = vadd.f32 0.0, %v1719
        %v1721 = vpop.f32.mrf.mxu0
        %v1722 = vpop.f32.mrf.mxu0
        %v1723 = vadd.f32 0.0, %v1722
        %v1724 = vpop.f32.mrf.mxu0
        %1725 = vmatprep.mubr.bf16.mxu0 0
        %1726 = vmatmul.mubr.bf16.gmra.mxu0 %v1640
        %v1727 = vpop.f32.mrf.mxu0
        %v1728 = vadd.f32 0.0, %v1727
        %v1729 = vpop.f32.mrf.mxu0
        %v1730 = vpop.f32.mrf.mxu0
        %v1731 = vadd.f32 0.0, %v1730
        %v1732 = vpop.f32.mrf.mxu0
        %1733 = vmatprep.mubr.bf16.mxu0 0
        %1734 = vmatmul.mubr.bf16.gmra.mxu0 %v1643
        %v1735 = vpop.f32.mrf.mxu0
        %v1736 = vadd.f32 0.0, %v1735
        %v1737 = vpop.f32.mrf.mxu0
        %v1738 = vpop.f32.mrf.mxu0
        %v1739 = vadd.f32 0.0, %v1738
        %v1740 = vpop.f32.mrf.mxu0
        %1741 = vdwg.mxu0
        %v1742 = vrcp.pop %v1535
        %v1743 = vrcp.pop %v1538
        %v1744 = vrcp.pop %v1541
        %v1745 = vrcp.pop %v1544
        %v1746 = vrcp.pop %v1547
        %v1747 = vrcp.pop %v1550
        %v1748 = vrcp.pop %v1553
        %v1749 = vrcp.pop %v1556
        %v1750 = vrcp.pop %v1559
        %v1751 = vrcp.pop %v1562
        %v1752 = vrcp.pop %v1565
        %v1753 = vrcp.pop %v1568
        %v1754 = vrcp.pop %v1571
        %v1755 = vrcp.pop %v1574
        %v1756 = vrcp.pop %v1577
        %v1757 = vrcp.pop %v1580
        %v1758 = vmul.f32 %v1680, %v1742
        %v1759 = vmul.f32 %v1683, %v1743
        %v1760 = vmul.f32 %v1688, %v1744
        %v1761 = vmul.f32 %v1691, %v1745
        %v1762 = vmul.f32 %v1696, %v1746
        %v1763 = vmul.f32 %v1699, %v1747
        %v1764 = vmul.f32 %v1704, %v1748
        %v1765 = vmul.f32 %v1707, %v1749
        %v1766 = vmul.f32 %v1712, %v1750
        %v1767 = vmul.f32 %v1715, %v1751
        %v1768 = vmul.f32 %v1720, %v1752
        %v1769 = vmul.f32 %v1723, %v1753
        %v1770 = vmul.f32 %v1728, %v1754
        %v1771 = vmul.f32 %v1731, %v1755
        %v1772 = vmul.f32 %v1736, %v1756
        %v1773 = vmul.f32 %v1739, %v1757
        %v1774 = vpack.c.bf16 %v1759, %v1758
        %v1775 = vpack.c.bf16 %v1761, %v1760
        %v1776 = vpack.c.bf16 %v1763, %v1762
        %v1777 = vpack.c.bf16 %v1765, %v1764
        %v1778 = vpack.c.bf16 %v1767, %v1766
        %v1779 = vpack.c.bf16 %v1769, %v1768
        %v1780 = vpack.c.bf16 %v1771, %v1770
        %v1781 = vpack.c.bf16 %v1773, %v1772
        %v1782 = vld [vmem:[#allocation12] sm:$0xf]
        %v1783 = vld [vmem:[#allocation12 + $0x4] sm:$0xf]
        %v1784 = vld [vmem:[#allocation12 + $0x8] sm:$0xf]
        %v1785 = vld [vmem:[#allocation12 + $0xc] sm:$0xf]
        %v1786 = vld [vmem:[#allocation12 + $0x10] sm:$0xf]
        %v1787 = vld [vmem:[#allocation12 + $0x14] sm:$0xf]
        %v1788 = vld [vmem:[#allocation12 + $0x18] sm:$0xf]
        %v1789 = vld [vmem:[#allocation12 + $0x1c] sm:$0xf]
        %v1790 = vld [vmem:[#allocation12 + $0x20] sm:$0xf]
        %v1791 = vld [vmem:[#allocation12 + $0x24] sm:$0xf]
        %v1792 = vld [vmem:[#allocation12 + $0x28] sm:$0xf]
        %v1793 = vld [vmem:[#allocation12 + $0x2c] sm:$0xf]
        %v1794 = vld [vmem:[#allocation12 + $0x30] sm:$0xf]
        %v1795 = vld [vmem:[#allocation12 + $0x34] sm:$0xf]
        %v1796 = vld [vmem:[#allocation12 + $0x38] sm:$0xf]
        %v1797 = vld [vmem:[#allocation12 + $0x3c] sm:$0xf]
        %v1798 = vld [vmem:[%s7] sm:$0x1]
        %v1800 = vlaneseq
        %v1801 = vshrl.u32 %v1800, 7
        %v1802 = vsub.s32 0, %v1801
        %v1803 = vrot.slane %v1798, %v1802
        %v1821 = vunpack.c.l.b16 %v1782
        %v1822 = vunpack.c.l.b16 %v1783
        %v1823 = vunpack.c.l.b16 %v1784
        %v1824 = vunpack.c.l.b16 %v1785
        %v1825 = vunpack.c.l.b16 %v1786
        %v1826 = vunpack.c.l.b16 %v1787
        %v1827 = vunpack.c.l.b16 %v1788
        %v1828 = vunpack.c.l.b16 %v1789
        %v1829 = vunpack.c.l.b16 %v1790
        %v1830 = vunpack.c.l.b16 %v1791
        %v1831 = vunpack.c.l.b16 %v1792
        %v1832 = vunpack.c.l.b16 %v1793
        %v1833 = vunpack.c.l.b16 %v1794
        %v1834 = vunpack.c.l.b16 %v1795
        %v1835 = vunpack.c.l.b16 %v1796
        %v1836 = vunpack.c.l.b16 %v1797
        %v1837 = vpack.c.b16 %v1822, %v1821
        %v1838 = vpack.c.b16 %v1824, %v1823
        %v1839 = vpack.c.b16 %v1826, %v1825
        %v1840 = vpack.c.b16 %v1828, %v1827
        %v1841 = vpack.c.b16 %v1830, %v1829
        %v1842 = vpack.c.b16 %v1832, %v1831
        %v1843 = vpack.c.b16 %v1834, %v1833
        %v1844 = vpack.c.b16 %v1836, %v1835
        %1853 = vmatprep.subr.bf16.mxu0 0
        %1854 = vmatpush1.bf16.msra.mxu0 %v1844
        %1855 = vmatprep.subr.bf16.mxu0 0
        %1856 = vmatpush1.bf16.msra.mxu0 %v1843
        %1857 = vmatprep.subr.bf16.mxu0 0
        %1858 = vmatpush1.bf16.msra.mxu0 %v1842
        %1859 = vmatprep.subr.bf16.mxu0 0
        %1860 = vmatpush1.bf16.msra.mxu0 %v1841
        %1861 = vmatprep.subr.bf16.mxu0 0
        %1862 = vmatpush1.bf16.msra.mxu0 %v1840
        %1863 = vmatprep.subr.bf16.mxu0 0
        %1864 = vmatpush1.bf16.msra.mxu0 %v1839
        %1865 = vmatprep.subr.bf16.mxu0 0
        %1866 = vmatpush1.bf16.msra.mxu0 %v1838
        %1867 = vmatprep.subr.bf16.mxu0 0
        %1868 = vmatpush1.bf16.msra.mxu0 %v1837
        %1869 = vmatprep.subr.bf16.mxu0 0
        %1870 = vmatpush2.bf16.msra.mxu0 0
        %1871 = vmatprep.subr.bf16.mxu0 0
        %1872 = vmatpush2.bf16.msra.mxu0 0
        %1873 = vmatprep.subr.bf16.mxu0 0
        %1874 = vmatpush2.bf16.msra.mxu0 0
        %1875 = vmatprep.subr.bf16.mxu0 0
        %1876 = vmatpush2.bf16.msra.mxu0 0
        %1877 = vmatprep.subr.bf16.mxu0 0
        %1878 = vmatpush2.bf16.msra.mxu0 0
        %1879 = vmatprep.subr.bf16.mxu0 0
        %1880 = vmatpush2.bf16.msra.mxu0 0
        %1881 = vmatprep.subr.bf16.mxu0 0
        %1882 = vmatpush2.bf16.msra.mxu0 0
        %1883 = vmatprep.subr.bf16.mxu0 0
        %1884 = vmatpush2.bf16.msra.mxu0 0
        %1885 = vmatprep.mubr.bf16.mxu0 0
        %1886 = vmatmul.mubr.bf16.gmra.mxu0 %v1774
        %v1887 = vpop.f32.mrf.mxu0
        %v1888 = vadd.f32 %v1803, %v1887
        %v1889 = vpop.f32.mrf.mxu0
        %v1890 = vpop.f32.mrf.mxu0
        %v1891 = vadd.f32 %v1803, %v1890
        %v1892 = vpop.f32.mrf.mxu0
        %1893 = vmatprep.mubr.bf16.mxu0 0
        %1894 = vmatmul.mubr.bf16.gmra.mxu0 %v1775
        %v1895 = vpop.f32.mrf.mxu0
        %v1896 = vadd.f32 %v1803, %v1895
        %v1897 = vpop.f32.mrf.mxu0
        %v1898 = vpop.f32.mrf.mxu0
        %v1899 = vadd.f32 %v1803, %v1898
        %v1900 = vpop.f32.mrf.mxu0
        %1901 = vmatprep.mubr.bf16.mxu0 0
        %1902 = vmatmul.mubr.bf16.gmra.mxu0 %v1776
        %v1903 = vpop.f32.mrf.mxu0
        %v1904 = vadd.f32 %v1803, %v1903
        %v1905 = vpop.f32.mrf.mxu0
        %v1906 = vpop.f32.mrf.mxu0
        %v1907 = vadd.f32 %v1803, %v1906
        %v1908 = vpop.f32.mrf.mxu0
        %1909 = vmatprep.mubr.bf16.mxu0 0
        %1910 = vmatmul.mubr.bf16.gmra.mxu0 %v1777
        %v1911 = vpop.f32.mrf.mxu0
        %v1912 = vadd.f32 %v1803, %v1911
        %v1913 = vpop.f32.mrf.mxu0
        %v1914 = vpop.f32.mrf.mxu0
        %v1915 = vadd.f32 %v1803, %v1914
        %v1916 = vpop.f32.mrf.mxu0
        %1917 = vmatprep.mubr.bf16.mxu0 0
        %1918 = vmatmul.mubr.bf16.gmra.mxu0 %v1778
        %v1919 = vpop.f32.mrf.mxu0
        %v1920 = vadd.f32 %v1803, %v1919
        %v1921 = vpop.f32.mrf.mxu0
        %v1922 = vpop.f32.mrf.mxu0
        %v1923 = vadd.f32 %v1803, %v1922
        %v1924 = vpop.f32.mrf.mxu0
        %1925 = vmatprep.mubr.bf16.mxu0 0
        %1926 = vmatmul.mubr.bf16.gmra.mxu0 %v1779
        %v1927 = vpop.f32.mrf.mxu0
        %v1928 = vadd.f32 %v1803, %v1927
        %v1929 = vpop.f32.mrf.mxu0
        %v1930 = vpop.f32.mrf.mxu0
        %v1931 = vadd.f32 %v1803, %v1930
        %v1932 = vpop.f32.mrf.mxu0
        %1933 = vmatprep.mubr.bf16.mxu0 0
        %1934 = vmatmul.mubr.bf16.gmra.mxu0 %v1780
        %v1935 = vpop.f32.mrf.mxu0
        %v1936 = vadd.f32 %v1803, %v1935
        %v1937 = vpop.f32.mrf.mxu0
        %v1938 = vpop.f32.mrf.mxu0
        %v1939 = vadd.f32 %v1803, %v1938
        %v1940 = vpop.f32.mrf.mxu0
        %1941 = vmatprep.mubr.bf16.mxu0 0
        %1942 = vmatmul.mubr.bf16.gmra.mxu0 %v1781
        %v1943 = vpop.f32.mrf.mxu0
        %v1944 = vadd.f32 %v1803, %v1943
        %v1945 = vpop.f32.mrf.mxu0
        %v1946 = vpop.f32.mrf.mxu0
        %v1947 = vadd.f32 %v1803, %v1946
        %v1948 = vpop.f32.mrf.mxu0
        %1949 = vdwg.mxu0
        %v1950 = vadd.f32 %v1888, %v1107
        %v1951 = vadd.f32 %v1891, %v1108
        %v1952 = vadd.f32 %v1896, %v1109
        %v1953 = vadd.f32 %v1899, %v1110
        %v1954 = vadd.f32 %v1904, %v1111
        %v1955 = vadd.f32 %v1907, %v1112
        %v1956 = vadd.f32 %v1912, %v1113
        %v1957 = vadd.f32 %v1915, %v1114
        %v1958 = vadd.f32 %v1920, %v1115
        %v1959 = vadd.f32 %v1923, %v1116
        %v1960 = vadd.f32 %v1928, %v1117
        %v1961 = vadd.f32 %v1931, %v1118
        %v1962 = vadd.f32 %v1936, %v1119
        %v1963 = vadd.f32 %v1939, %v1120
        %v1964 = vadd.f32 %v1944, %v1121
        %v1965 = vadd.f32 %v1947, %v1122
        %1966 = vst [vmem:[%s424] sm:$0xff] %v1950
        %1967 = vst [vmem:[%s424 + $0x8] sm:$0xff] %v1951
        %1968 = vst [vmem:[%s424 + $0x10] sm:$0xff] %v1952
        %1969 = vst [vmem:[%s424 + $0x18] sm:$0xff] %v1953
        %1970 = vst [vmem:[%s424 + $0x20] sm:$0xff] %v1954
        %1971 = vst [vmem:[%s424 + $0x28] sm:$0xff] %v1955
        %1972 = vst [vmem:[%s424 + $0x30] sm:$0xff] %v1956
        %1973 = vst [vmem:[%s424 + $0x38] sm:$0xff] %v1957
        %1974 = vst [vmem:[%s424 + $0x40] sm:$0xff] %v1958
        %1975 = vst [vmem:[%s424 + $0x48] sm:$0xff] %v1959
        %1976 = vst [vmem:[%s424 + $0x50] sm:$0xff] %v1960
        %1977 = vst [vmem:[%s424 + $0x58] sm:$0xff] %v1961
        %1978 = vst [vmem:[%s424 + $0x60] sm:$0xff] %v1962
        %1979 = vst [vmem:[%s424 + $0x68] sm:$0xff] %v1963
        %1980 = vst [vmem:[%s424 + $0x70] sm:$0xff] %v1964
        %1981 = vst [vmem:[%s424 + $0x78] sm:$0xff] %v1965
        %s1982 = sand.u32 %s231, 1
        %s1983 = scalar_lea.sflag [#allocation6], %s1982
        %s1984 = sand.u32 %s231, 1
        %s1985 = smul.addr %s1984, 128
        %s1986 = scalar_lea.vmem [#allocation13], %s1985
        // Predicated region
        $region77: #{tpu_custom_call.1} parent=51 // pred_check
          %p1987 = pneg %p241
        $region78: #{tpu_custom_call.1} parent=51 // pred_check_branch
          %1989 = sbr.rel (%p1987) target = $region80
        $region79: #{tpu_custom_call.1} parent=51 // pred_region
          %s1990 = smul.u32 16, %s34
          %s1992 = ssub.s32 2048, 2048
          %1993 = vsyncadd %s1983, %s1992
          %s1994 = smul.addr %s33, 32
          %s1995 = sadd.s32 %s1990, %s1994
          %s1996 = smul.addr %s1995, 128
          %s1997 = scalar_lea.hbm %s8, %s1996
          %s1998 = sshll.u32 %s1986, 4
          %s1999 = int_to_ptr.vmem [resolvable:$true] %s1998
          %2004 = dma.vmem_to_hbm [thread:$0]  %s1999, 2048, %s1997, %s1983, 128, 128, 8
        $region80: #{tpu_custom_call.1} parent=51 // pred_fallthru
          _
      $region52: #{tpu_custom_call.1} parent=5 // pred_fallthru
        _
      %p2005 = scmp.le.s32.totalorder 2, %s24
      // Predicated region
      $region81: #{tpu_custom_call.1} parent=5 // pred_check
        %p2006 = pneg %p2005
      $region82: #{tpu_custom_call.1} parent=5 // pred_check_branch
        %2008 = sbr.rel (%p2006) target = $region84
      $region83: #{tpu_custom_call.1} parent=5 // pred_region
        %s2009 = ssub.s32 %s24, 2
        // Predicated region
        $region85: #{tpu_custom_call.1} parent=83 // pred_check
          %p2010 = pneg %p247
        $region86: #{tpu_custom_call.1} parent=83 // pred_check_branch
          %2012 = sbr.rel (%p2010) target = $region88
        $region87: #{tpu_custom_call.1} parent=83 // pred_region
          %s2013 = sand.u32 %s232, 1
          %s2014 = scalar_lea.sflag [#allocation6], %s2013
          %s2015 = sand.u32 %s232, 1
          %s2016 = smul.addr %s2015, 128
          %s2017 = scalar_lea.vmem [#allocation13], %s2016
          %2018 = dma.done %s2014, 2048
        $region88: #{tpu_custom_call.1} parent=83 // pred_fallthru
          _
      $region84: #{tpu_custom_call.1} parent=5 // pred_fallthru
        _
    $region6: #{tpu_custom_call.1} parent=1 // loop_footer
      %s28 = sadd.s32 1, %s24
    $region7: #{tpu_custom_call.1} parent=1 // loop_footer_branch
      %23 = sbr.rel target = $region3
    $region8: #{tpu_custom_call.1} parent=1 // loop_exit
      _
    %2019 = vsyncpa [#allocation5], 1
    %s2020 = scalar_lea.sflag [#allocation5], 1
    %2021 = vsyncpa %s2020, 1
    %2022 = vsyncpa [#allocation8], 1
    %s2023 = scalar_lea.sflag [#allocation8], 1
    %2024 = vsyncpa %s2023, 1
    %2025 = vsyncpa [#allocation11], 1
    %2026 = vsyncpa [#allocation6], 1
    %s2027 = scalar_lea.sflag [#allocation6], 1
    %2028 = vsyncpa %s2027, 1

</llo_original>
